<compile_context>
chip_gen: v7x
topology: tpu7x:2x2x1
jax: 0.10.0
libtpu: 0.0.40
codegen_flags: <defaults>
</compile_context>

<pallas_src>
import jax
import jax.numpy as jnp
from jax.experimental import pallas as pl
from jax.experimental.pallas import tpu as pltpu

# ---- hyper-parameters from the PyTorch module ------------------------------
INPUT_SIZE = 40688          # vocabulary size
HIDDEN = 128                # hidden_size (embed dim, also dim_feedforward)
NUM_CLASSES = 7
NUM_HEADS = 8
NUM_LAYERS = 2
HEAD_DIM = HIDDEN // NUM_HEADS
FFN = HIDDEN                # dim_feedforward = hidden_size in the module
LN_EPS = 1e-5               # PyTorch LayerNorm default
FC_PAD = 128                # lane-dense padded classifier width

# packed per-layer vector rows (each row is length HIDDEN):
#   0: out_proj bias, 1: ln1 w, 2: ln1 b, 3: linear1 b, 4: linear2 b,
#   5: ln2 w, 6: ln2 b
N_VEC_ROWS = 7


# ---- in-kernel helpers ------------------------------------------------------
def _layernorm(x, w, b):
    # x: (rows, H); w, b: (1, H). Biased variance (PyTorch semantics), f32 math.
    mu = jnp.mean(x, axis=-1, keepdims=True)
    var = jnp.mean(jnp.square(x - mu), axis=-1, keepdims=True)
    return (x - mu) * jax.lax.rsqrt(var + LN_EPS) * w + b


# ---- fused kernel: grid over layers, mean + classifier on last step ---------
def fused_forward_kernel(x_ref, w_ref, bqkv_ref, v_ref, hsum_ref, wfc_ref,
                         bfc_ref, out_ref, h_scr):
    layer = pl.program_id(0)
    A, N, H = x_ref.shape
    R = A * N

    @pl.when(layer == 0)
    def _():
        h_scr[...] = x_ref[...].astype(jnp.float32).reshape(R, H)

    h = h_scr[...]                                              # (R, H) f32

    # ---- fused QKV projection: bf16 MXU operands, f32 accumulation ---------
    qkv = jnp.dot(h.astype(jnp.bfloat16), w_ref[:, 0:3 * H],
                  preferred_element_type=jnp.float32) + bqkv_ref[...]  # (R, 3H)

    # per-position (N, H) views; attention scale & q bias already folded in.
    q = [qkv[a * N:(a + 1) * N, 0 * H:1 * H] for a in range(A)]
    k = [qkv[a * N:(a + 1) * N, 1 * H:2 * H] for a in range(A)]
    v = [qkv[a * N:(a + 1) * N, 2 * H:3 * H] for a in range(A)]

    # ---- multi-head attention, fully lane-dense -----------------------------
    # HSUM[d, e] = 1 iff lanes d and e belong to the same head, so
    #   S_ij = (q_i * k_j) @ HSUM
    # holds score s[n, head, i, j] replicated across that head's 16 lanes.
    prod = jnp.concatenate([q[i] * k[j] for i in range(A) for j in range(A)],
                           axis=0)                              # (A*A*N, H) f32
    # one tiny f32 matmul (A*A*N rows) keeps score precision at f32
    s_all = jnp.dot(prod, hsum_ref[...], preferred_element_type=jnp.float32)
    s = [[s_all[(i * A + j) * N:(i * A + j + 1) * N, :] for j in range(A)]
         for i in range(A)]

    attn_rows = []
    for i in range(A):                       # static unroll, A is tiny
        m = s[i][0]
        for j in range(1, A):
            m = jnp.maximum(m, s[i][j])
        e = [jnp.exp(s[i][j] - m) for j in range(A)]
        denom = e[0]
        for j in range(1, A):
            denom = denom + e[j]
        o = e[0] * v[0]
        for j in range(1, A):
            o = o + e[j] * v[j]
        attn_rows.append(o * pl.reciprocal(denom, approx=True))
    attn = jnp.concatenate(attn_rows, axis=0)                   # (R, H) f32

    # ---- output projection + residual + LayerNorm1 --------------------------
    attn = jnp.dot(attn.astype(jnp.bfloat16), w_ref[:, 3 * H:4 * H],
                   preferred_element_type=jnp.float32) + v_ref[0:1, :]
    h1 = _layernorm(h + attn, v_ref[1:2, :], v_ref[2:3, :])

    # ---- feed-forward (Linear -> ReLU -> Linear) + residual + LayerNorm2 ----
    f = jnp.dot(h1.astype(jnp.bfloat16), w_ref[:, 4 * H:5 * H],
                preferred_element_type=jnp.float32) + v_ref[3:4, :]
    f = jnp.maximum(f, 0.0)
    f = jnp.dot(f.astype(jnp.bfloat16), w_ref[:, 5 * H:6 * H],
                preferred_element_type=jnp.float32) + v_ref[4:5, :]
    h_new = _layernorm(h1 + f, v_ref[5:6, :], v_ref[6:7, :])
    h_scr[...] = h_new                                          # carry to next layer

    # ---- mean over the PyTorch dim=1 axis + classifier (last layer only) ----
    @pl.when(layer == pl.num_programs(0) - 1)
    def _():
        pooled = jnp.mean(h_new.reshape(A, N, H), axis=1)       # (A, H)
        out_ref[...] = (jnp.dot(pooled.astype(jnp.bfloat16), wfc_ref[...],
                                preferred_element_type=jnp.float32)
                        + bfc_ref[...])


# ---- pallas_call wrapper -----------------------------------------------------
def transformer_model(x_ids, params):
    # nn.Embedding gather in plain JAX; kernel consumes (A, N, H) directly.
    emb = jnp.take(params['embedding'], x_ids, axis=0)          # (A, N, H) bf16
    A, N = x_ids.shape

    out_pad = pl.pallas_call(
        fused_forward_kernel,
        out_shape=jax.ShapeDtypeStruct((A, FC_PAD), jnp.float32),
        grid_spec=pltpu.PrefetchScalarGridSpec(
            num_scalar_prefetch=0,
            grid=(NUM_LAYERS,),
            in_specs=[
                pl.BlockSpec((A, N, HIDDEN), lambda l: (0, 0, 0)),              # x
                pl.BlockSpec((None, HIDDEN, 6 * HIDDEN), lambda l: (l, 0, 0)),  # W slab
                pl.BlockSpec((None, 1, 3 * HIDDEN), lambda l: (l, 0, 0)),       # qkv bias
                pl.BlockSpec((None, N_VEC_ROWS, HIDDEN), lambda l: (l, 0, 0)),  # vectors
                pl.BlockSpec((HIDDEN, HIDDEN), lambda l: (0, 0)),               # head-sum
                pl.BlockSpec((HIDDEN, FC_PAD), lambda l: (0, 0)),               # fc W
                pl.BlockSpec((1, FC_PAD), lambda l: (0, 0)),                    # fc b
            ],
            out_specs=pl.BlockSpec((A, FC_PAD), lambda l: (0, 0)),
            scratch_shapes=[pltpu.VMEM((A * N, HIDDEN), jnp.float32)],
        ),
        compiler_params=pltpu.CompilerParams(
            dimension_semantics=("arbitrary",)),
    )(emb, params['w_packed'], params['bqkv_packed'], params['v_packed'],
      params['hsum'], params['wfc_pad'], params['bfc_pad'])

    return out_pad[:, :NUM_CLASSES]                             # (A, NUM_CLASSES)


# ---- deterministic synthetic parameters -------------------------------------
def init_params(key):
    ks = jax.random.split(key, 2 + NUM_LAYERS)

    def nrm(k, shape, s=0.02):
        return jax.random.normal(k, shape, dtype=jnp.float32) * s

    embedding = nrm(ks[0], (INPUT_SIZE, HIDDEN)).astype(jnp.bfloat16)

    wfc = nrm(ks[1], (HIDDEN, NUM_CLASSES))
    wfc_pad = (jnp.zeros((HIDDEN, FC_PAD), jnp.float32)
               .at[:, :NUM_CLASSES].set(wfc).astype(jnp.bfloat16))
    bfc_pad = jnp.zeros((1, FC_PAD), jnp.float32)

    scale = 1.0 / (HEAD_DIM ** 0.5)
    w_layers, bqkv_layers, v_layers = [], [], []
    for i in range(NUM_LAYERS):
        lk = jax.random.split(ks[2 + i], 4)
        # weights stored pre-transposed so kernels do x @ W
        wqkv = nrm(lk[0], (HIDDEN, 3 * HIDDEN))                  # in_proj_weight.T
        # fold the 1/sqrt(head_dim) attention scale into the q columns
        wqkv = jnp.concatenate([wqkv[:, :HIDDEN] * scale, wqkv[:, HIDDEN:]], axis=1)
        wo = nrm(lk[1], (HIDDEN, HIDDEN))                        # out_proj.weight.T
        w1 = nrm(lk[2], (HIDDEN, FFN))                           # linear1.weight.T
        w2 = nrm(lk[3], (FFN, HIDDEN))                           # linear2.weight.T
        w_layers.append(jnp.concatenate([wqkv, wo, w1, w2], axis=1))    # (H, 6H)

        # in_proj bias (PyTorch inits to zeros); q part pre-scaled like wq
        bq = jnp.zeros((HIDDEN,), jnp.float32) * scale
        bkv = jnp.zeros((2 * HIDDEN,), jnp.float32)
        bqkv_layers.append(jnp.concatenate([bq, bkv]).reshape(1, 3 * HIDDEN))

        vec = jnp.stack([
            jnp.zeros((HIDDEN,), jnp.float32),   # 0: out_proj bias
            jnp.ones((HIDDEN,), jnp.float32),    # 1: ln1 weight
            jnp.zeros((HIDDEN,), jnp.float32),   # 2: ln1 bias
            jnp.zeros((HIDDEN,), jnp.float32),   # 3: linear1 bias
            jnp.zeros((HIDDEN,), jnp.float32),   # 4: linear2 bias
            jnp.ones((HIDDEN,), jnp.float32),    # 5: ln2 weight
            jnp.zeros((HIDDEN,), jnp.float32),   # 6: ln2 bias
        ])                                        # (7, H)
        v_layers.append(vec)

    # block-diagonal head-sum matrix: HSUM[d, e] = 1 iff d, e in the same head
    lane = jnp.arange(HIDDEN)
    hsum = (lane[:, None] // HEAD_DIM == lane[None, :] // HEAD_DIM).astype(jnp.float32)

    return {
        'embedding': embedding,                                   # (V, H) bf16
        'w_packed': jnp.stack(w_layers).astype(jnp.bfloat16),     # (L, H, 6H) bf16
        'bqkv_packed': jnp.stack(bqkv_layers),                    # (L, 1, 3H) f32
        'v_packed': jnp.stack(v_layers),                          # (L, 7, H) f32
        'hsum': hsum,                                             # (H, H) f32
        'wfc_pad': wfc_pad,                                       # (H, 128) bf16
        'bfc_pad': bfc_pad,                                       # (1, 128) f32
    }


if __name__ == "__main__":
    key = jax.random.PRNGKey(0)
    kx, kp = jax.random.split(key)

    # x: integer token ids, shape (batch=2, seq=8) as fed to the module.
    B, S = 2, 8
    x_ids = jax.random.randint(kx, (B, S), 0, INPUT_SIZE, dtype=jnp.int32)

    params = init_params(kp)
    fwd = jax.jit(transformer_model)
    out = fwd(x_ids, params)
    out = jax.block_until_ready(out)

    assert out.shape == (B, NUM_CLASSES), out.shape
    assert bool(jnp.all(jnp.isfinite(out)))
    print("KERNEL_OK")
</pallas_src>

<mosaic_0001>
module attributes {stable_mosaic.version = 11 : i64} {
  func.func @fused_forward_kernel(%arg0: i32, %arg1: memref<2x8x128xbf16, #tpu.memory_space<vmem>>, %arg2: memref<1x128x768xbf16, #tpu.memory_space<vmem>>, %arg3: memref<1x1x384xf32, #tpu.memory_space<vmem>>, %arg4: memref<1x7x128xf32, #tpu.memory_space<vmem>>, %arg5: memref<128x128xf32, #tpu.memory_space<vmem>>, %arg6: memref<128x128xbf16, #tpu.memory_space<vmem>>, %arg7: memref<1x128xf32, #tpu.memory_space<vmem>>, %arg8: memref<2x128xf32, #tpu.memory_space<vmem>>, %arg9: memref<16x128xf32, #tpu.memory_space<vmem>>) attributes {dimension_semantics = [#tpu.dimension_semantics<arbitrary>], iteration_bounds = array<i64: 2>, scalar_prefetch = 0 : i64, scratch_operands = 1 : i64, tpu.core_type = #tpu.core_type<tc>, window_params = [{pipeline_mode = #tpu.pipeline_mode<synchronous>, transform_indices = @transform_0, window_bounds = array<i64: 2, 8, 128>}, {transform_indices = @transform_1, window_bounds = array<i64: 1, 128, 768>}, {transform_indices = @transform_2, window_bounds = array<i64: 1, 1, 384>}, {transform_indices = @transform_3, window_bounds = array<i64: 1, 7, 128>}, {pipeline_mode = #tpu.pipeline_mode<synchronous>, transform_indices = @transform_4, window_bounds = array<i64: 128, 128>}, {pipeline_mode = #tpu.pipeline_mode<synchronous>, transform_indices = @transform_5, window_bounds = array<i64: 128, 128>}, {pipeline_mode = #tpu.pipeline_mode<synchronous>, transform_indices = @transform_6, window_bounds = array<i64: 1, 128>}, {pipeline_mode = #tpu.pipeline_mode<synchronous>, transform_indices = @transform_7, window_bounds = array<i64: 2, 128>}]} {
    %c0_i32 = arith.constant 0 : i32
    %0 = arith.cmpi eq, %arg0, %c0_i32 : i32
    %1 = arith.extui %0 : i1 to i32
    %c0_i32_0 = arith.constant 0 : i32
    %2 = arith.cmpi ne, %1, %c0_i32_0 : i32
    scf.if %2 {
      %c0_49 = arith.constant 0 : index
      %c0_50 = arith.constant 0 : index
      %c0_51 = arith.constant 0 : index
      %136 = vector.load %arg1[%c0_49, %c0_50, %c0_51] : memref<2x8x128xbf16, #tpu.memory_space<vmem>>, vector<2x8x128xbf16>
      %137 = arith.extf %136 : vector<2x8x128xbf16> to vector<2x8x128xf32>
      %138 = vector.shape_cast %137 : vector<2x8x128xf32> to vector<16x128xf32>
      %c0_52 = arith.constant 0 : index
      %c0_53 = arith.constant 0 : index
      %139 = vector.load %arg9[%c0_52, %c0_53] : memref<16x128xf32, #tpu.memory_space<vmem>>, vector<16x128xf32>
      tpu.vector_store %arg9[%c0_52, %c0_53], %138 {strides = array<i32>} : memref<16x128xf32, #tpu.memory_space<vmem>>, vector<16x128xf32>,
    } else {
    }
    %c0 = arith.constant 0 : index
    %c0_1 = arith.constant 0 : index
    %3 = vector.load %arg9[%c0, %c0_1] : memref<16x128xf32, #tpu.memory_space<vmem>>, vector<16x128xf32>
    %4 = arith.truncf %3 : vector<16x128xf32> to vector<16x128xbf16>
    %c0_2 = arith.constant 0 : index
    %c0_3 = arith.constant 0 : index
    %c0_4 = arith.constant 0 : index
    %5 = vector.load %arg2[%c0_2, %c0_3, %c0_4] : memref<1x128x768xbf16, #tpu.memory_space<vmem>>, vector<1x128x384xbf16>
    %6 = vector.shape_cast %5 : vector<1x128x384xbf16> to vector<128x384xbf16>
    %cst = arith.constant dense<0.000000e+00> : vector<16x384xf32>
    %7 = tpu.matmul %4, %6, %cst {dimension_numbers = #tpu.dot_dimension_numbers<[1], [0], [0], [1], [0, 0, 1, 1], [], []>} : vector<16x128xbf16>, vector<128x384xbf16>, vector<16x384xf32> -> vector<16x384xf32>
    %c0_5 = arith.constant 0 : index
    %c0_6 = arith.constant 0 : index
    %c0_7 = arith.constant 0 : index
    %8 = vector.load %arg3[%c0_5, %c0_6, %c0_7] : memref<1x1x384xf32, #tpu.memory_space<vmem>>, vector<1x1x384xf32>
    %9 = vector.shape_cast %8 : vector<1x1x384xf32> to vector<1x384xf32>
    %10 = vector.broadcast %9 : vector<1x384xf32> to vector<16x384xf32>
    %11 = arith.addf %7, %10 : vector<16x384xf32>
    %12 = vector.extract_strided_slice %11 {offsets = [0, 0], sizes = [8, 128], strides = [1, 1]} : vector<16x384xf32> to vector<8x128xf32>
    %13 = vector.extract_strided_slice %11 {offsets = [8, 0], sizes = [8, 128], strides = [1, 1]} : vector<16x384xf32> to vector<8x128xf32>
    %14 = vector.extract_strided_slice %11 {offsets = [0, 128], sizes = [8, 128], strides = [1, 1]} : vector<16x384xf32> to vector<8x128xf32>
    %15 = vector.extract_strided_slice %11 {offsets = [8, 128], sizes = [8, 128], strides = [1, 1]} : vector<16x384xf32> to vector<8x128xf32>
    %16 = vector.extract_strided_slice %11 {offsets = [0, 256], sizes = [8, 128], strides = [1, 1]} : vector<16x384xf32> to vector<8x128xf32>
    %17 = vector.extract_strided_slice %11 {offsets = [8, 256], sizes = [8, 128], strides = [1, 1]} : vector<16x384xf32> to vector<8x128xf32>
    %18 = arith.mulf %12, %14 : vector<8x128xf32>
    %19 = arith.mulf %12, %15 : vector<8x128xf32>
    %20 = arith.mulf %13, %14 : vector<8x128xf32>
    %21 = arith.mulf %13, %15 : vector<8x128xf32>
    %22 = tpu.concatenate %18, %19, %20, %21 in 0 : vector<8x128xf32>, vector<8x128xf32>, vector<8x128xf32>, vector<8x128xf32> -> vector<32x128xf32>
    %c0_8 = arith.constant 0 : index
    %c0_9 = arith.constant 0 : index
    %23 = vector.load %arg5[%c0_8, %c0_9] : memref<128x128xf32, #tpu.memory_space<vmem>>, vector<128x128xf32>
    %cst_10 = arith.constant dense<0.000000e+00> : vector<32x128xf32>
    %24 = tpu.matmul %22, %23, %cst_10 {dimension_numbers = #tpu.dot_dimension_numbers<[1], [0], [0], [1], [0, 0, 1, 1], [], []>} : vector<32x128xf32>, vector<128x128xf32>, vector<32x128xf32> -> vector<32x128xf32>
    %25 = vector.extract_strided_slice %24 {offsets = [0, 0], sizes = [8, 128], strides = [1, 1]} : vector<32x128xf32> to vector<8x128xf32>
    %26 = vector.extract_strided_slice %24 {offsets = [8, 0], sizes = [8, 128], strides = [1, 1]} : vector<32x128xf32> to vector<8x128xf32>
    %27 = vector.extract_strided_slice %24 {offsets = [16, 0], sizes = [8, 128], strides = [1, 1]} : vector<32x128xf32> to vector<8x128xf32>
    %28 = vector.extract_strided_slice %24 {offsets = [24, 0], sizes = [8, 128], strides = [1, 1]} : vector<32x128xf32> to vector<8x128xf32>
    %29 = arith.maximumf %25, %26 : vector<8x128xf32>
    %30 = arith.subf %25, %29 : vector<8x128xf32>
    %31 = math.exp %30 : vector<8x128xf32>
    %32 = arith.subf %26, %29 : vector<8x128xf32>
    %33 = math.exp %32 : vector<8x128xf32>
    %34 = arith.addf %31, %33 : vector<8x128xf32>
    %35 = arith.mulf %31, %16 : vector<8x128xf32>
    %36 = arith.mulf %33, %17 : vector<8x128xf32>
    %37 = arith.addf %35, %36 : vector<8x128xf32>
    %38 = tpu.reciprocal %34 {approx = true} : vector<8x128xf32> -> vector<8x128xf32>
    %39 = arith.mulf %37, %38 : vector<8x128xf32>
    %40 = arith.maximumf %27, %28 : vector<8x128xf32>
    %41 = arith.subf %27, %40 : vector<8x128xf32>
    %42 = math.exp %41 : vector<8x128xf32>
    %43 = arith.subf %28, %40 : vector<8x128xf32>
    %44 = math.exp %43 : vector<8x128xf32>
    %45 = arith.addf %42, %44 : vector<8x128xf32>
    %46 = arith.mulf %42, %16 : vector<8x128xf32>
    %47 = arith.mulf %44, %17 : vector<8x128xf32>
    %48 = arith.addf %46, %47 : vector<8x128xf32>
    %49 = tpu.reciprocal %45 {approx = true} : vector<8x128xf32> -> vector<8x128xf32>
    %50 = arith.mulf %48, %49 : vector<8x128xf32>
    %51 = tpu.concatenate %39, %50 in 0 : vector<8x128xf32>, vector<8x128xf32> -> vector<16x128xf32>
    %52 = arith.truncf %51 : vector<16x128xf32> to vector<16x128xbf16>
    %c0_11 = arith.constant 0 : index
    %c0_12 = arith.constant 0 : index
    %c384 = arith.constant 384 : index
    %53 = vector.load %arg2[%c0_11, %c0_12, %c384] : memref<1x128x768xbf16, #tpu.memory_space<vmem>>, vector<1x128x128xbf16>
    %54 = vector.shape_cast %53 : vector<1x128x128xbf16> to vector<128x128xbf16>
    %cst_13 = arith.constant dense<0.000000e+00> : vector<16x128xf32>
    %55 = tpu.matmul %52, %54, %cst_13 {dimension_numbers = #tpu.dot_dimension_numbers<[1], [0], [0], [1], [0, 0, 1, 1], [], []>} : vector<16x128xbf16>, vector<128x128xbf16>, vector<16x128xf32> -> vector<16x128xf32>
    %c0_14 = arith.constant 0 : index
    %c0_15 = arith.constant 0 : index
    %c0_16 = arith.constant 0 : index
    %56 = vector.load %arg4[%c0_14, %c0_15, %c0_16] : memref<1x7x128xf32, #tpu.memory_space<vmem>>, vector<1x1x128xf32>
    %57 = vector.shape_cast %56 : vector<1x1x128xf32> to vector<1x128xf32>
    %58 = vector.broadcast %57 : vector<1x128xf32> to vector<16x128xf32>
    %59 = arith.addf %55, %58 : vector<16x128xf32>
    %60 = arith.addf %3, %59 : vector<16x128xf32>
    %c0_17 = arith.constant 0 : index
    %c1 = arith.constant 1 : index
    %c0_18 = arith.constant 0 : index
    %61 = vector.load %arg4[%c0_17, %c1, %c0_18] : memref<1x7x128xf32, #tpu.memory_space<vmem>>, vector<1x1x128xf32>
    %62 = vector.shape_cast %61 : vector<1x1x128xf32> to vector<1x128xf32>
    %c0_19 = arith.constant 0 : index
    %c2 = arith.constant 2 : index
    %c0_20 = arith.constant 0 : index
    %63 = vector.load %arg4[%c0_19, %c2, %c0_20] : memref<1x7x128xf32, #tpu.memory_space<vmem>>, vector<1x1x128xf32>
    %64 = vector.shape_cast %63 : vector<1x1x128xf32> to vector<1x128xf32>
    %cst_21 = arith.constant dense<0.000000e+00> : vector<16xf32>
    %65 = vector.multi_reduction <add>, %60, %cst_21 [1] : vector<16x128xf32> to vector<16xf32>
    %66 = vector.shape_cast %65 : vector<16xf32> to vector<16x1xf32>
    %cst_22 = arith.constant 1.280000e+02 : f32
    %67 = vector.broadcast %cst_22 : f32 to vector<16x1xf32>
    %68 = arith.divf %66, %67 : vector<16x1xf32>
    %69 = vector.broadcast %68 : vector<16x1xf32> to vector<16x128xf32>
    %70 = arith.subf %60, %69 : vector<16x128xf32>
    %71 = arith.mulf %70, %70 : vector<16x128xf32>
    %cst_23 = arith.constant dense<0.000000e+00> : vector<16xf32>
    %72 = vector.multi_reduction <add>, %71, %cst_23 [1] : vector<16x128xf32> to vector<16xf32>
    %73 = vector.shape_cast %72 : vector<16xf32> to vector<16x1xf32>
    %cst_24 = arith.constant 1.280000e+02 : f32
    %74 = vector.broadcast %cst_24 : f32 to vector<16x1xf32>
    %75 = arith.divf %73, %74 : vector<16x1xf32>
    %76 = vector.broadcast %68 : vector<16x1xf32> to vector<16x128xf32>
    %77 = arith.subf %60, %76 : vector<16x128xf32>
    %cst_25 = arith.constant 9.99999974E-6 : f32
    %78 = vector.broadcast %cst_25 : f32 to vector<16x1xf32>
    %79 = arith.addf %75, %78 : vector<16x1xf32>
    %80 = math.rsqrt %79 : vector<16x1xf32>
    %81 = vector.broadcast %80 : vector<16x1xf32> to vector<16x128xf32>
    %82 = arith.mulf %77, %81 : vector<16x128xf32>
    %83 = vector.broadcast %62 : vector<1x128xf32> to vector<16x128xf32>
    %84 = arith.mulf %82, %83 : vector<16x128xf32>
    %85 = vector.broadcast %64 : vector<1x128xf32> to vector<16x128xf32>
    %86 = arith.addf %84, %85 : vector<16x128xf32>
    %87 = arith.truncf %86 : vector<16x128xf32> to vector<16x128xbf16>
    %c0_26 = arith.constant 0 : index
    %c0_27 = arith.constant 0 : index
    %c512 = arith.constant 512 : index
    %88 = vector.load %arg2[%c0_26, %c0_27, %c512] : memref<1x128x768xbf16, #tpu.memory_space<vmem>>, vector<1x128x128xbf16>
    %89 = vector.shape_cast %88 : vector<1x128x128xbf16> to vector<128x128xbf16>
    %cst_28 = arith.constant dense<0.000000e+00> : vector<16x128xf32>
    %90 = tpu.matmul %87, %89, %cst_28 {dimension_numbers = #tpu.dot_dimension_numbers<[1], [0], [0], [1], [0, 0, 1, 1], [], []>} : vector<16x128xbf16>, vector<128x128xbf16>, vector<16x128xf32> -> vector<16x128xf32>
    %c0_29 = arith.constant 0 : index
    %c3 = arith.constant 3 : index
    %c0_30 = arith.constant 0 : index
    %91 = vector.load %arg4[%c0_29, %c3, %c0_30] : memref<1x7x128xf32, #tpu.memory_space<vmem>>, vector<1x1x128xf32>
    %92 = vector.shape_cast %91 : vector<1x1x128xf32> to vector<1x128xf32>
    %93 = vector.broadcast %92 : vector<1x128xf32> to vector<16x128xf32>
    %94 = arith.addf %90, %93 : vector<16x128xf32>
    %cst_31 = arith.constant 0.000000e+00 : f32
    %95 = vector.broadcast %cst_31 : f32 to vector<16x128xf32>
    %96 = arith.maximumf %94, %95 : vector<16x128xf32>
    %97 = arith.truncf %96 : vector<16x128xf32> to vector<16x128xbf16>
    %c0_32 = arith.constant 0 : index
    %c0_33 = arith.constant 0 : index
    %c640 = arith.constant 640 : index
    %98 = vector.load %arg2[%c0_32, %c0_33, %c640] : memref<1x128x768xbf16, #tpu.memory_space<vmem>>, vector<1x128x128xbf16>
    %99 = vector.shape_cast %98 : vector<1x128x128xbf16> to vector<128x128xbf16>
    %cst_34 = arith.constant dense<0.000000e+00> : vector<16x128xf32>
    %100 = tpu.matmul %97, %99, %cst_34 {dimension_numbers = #tpu.dot_dimension_numbers<[1], [0], [0], [1], [0, 0, 1, 1], [], []>} : vector<16x128xbf16>, vector<128x128xbf16>, vector<16x128xf32> -> vector<16x128xf32>
    %c0_35 = arith.constant 0 : index
    %c4 = arith.constant 4 : index
    %c0_36 = arith.constant 0 : index
    %101 = vector.load %arg4[%c0_35, %c4, %c0_36] : memref<1x7x128xf32, #tpu.memory_space<vmem>>, vector<1x1x128xf32>
    %102 = vector.shape_cast %101 : vector<1x1x128xf32> to vector<1x128xf32>
    %103 = vector.broadcast %102 : vector<1x128xf32> to vector<16x128xf32>
    %104 = arith.addf %100, %103 : vector<16x128xf32>
    %105 = arith.addf %86, %104 : vector<16x128xf32>
    %c0_37 = arith.constant 0 : index
    %c5 = arith.constant 5 : index
    %c0_38 = arith.constant 0 : index
    %106 = vector.load %arg4[%c0_37, %c5, %c0_38] : memref<1x7x128xf32, #tpu.memory_space<vmem>>, vector<1x1x128xf32>
    %107 = vector.shape_cast %106 : vector<1x1x128xf32> to vector<1x128xf32>
    %c0_39 = arith.constant 0 : index
    %c6 = arith.constant 6 : index
    %c0_40 = arith.constant 0 : index
    %108 = vector.load %arg4[%c0_39, %c6, %c0_40] : memref<1x7x128xf32, #tpu.memory_space<vmem>>, vector<1x1x128xf32>
    %109 = vector.shape_cast %108 : vector<1x1x128xf32> to vector<1x128xf32>
    %cst_41 = arith.constant dense<0.000000e+00> : vector<16xf32>
    %110 = vector.multi_reduction <add>, %105, %cst_41 [1] : vector<16x128xf32> to vector<16xf32>
    %111 = vector.shape_cast %110 : vector<16xf32> to vector<16x1xf32>
    %cst_42 = arith.constant 1.280000e+02 : f32
    %112 = vector.broadcast %cst_42 : f32 to vector<16x1xf32>
    %113 = arith.divf %111, %112 : vector<16x1xf32>
    %114 = vector.broadcast %113 : vector<16x1xf32> to vector<16x128xf32>
    %115 = arith.subf %105, %114 : vector<16x128xf32>
    %116 = arith.mulf %115, %115 : vector<16x128xf32>
    %cst_43 = arith.constant dense<0.000000e+00> : vector<16xf32>
    %117 = vector.multi_reduction <add>, %116, %cst_43 [1] : vector<16x128xf32> to vector<16xf32>
    %118 = vector.shape_cast %117 : vector<16xf32> to vector<16x1xf32>
    %cst_44 = arith.constant 1.280000e+02 : f32
    %119 = vector.broadcast %cst_44 : f32 to vector<16x1xf32>
    %120 = arith.divf %118, %119 : vector<16x1xf32>
    %121 = vector.broadcast %113 : vector<16x1xf32> to vector<16x128xf32>
    %122 = arith.subf %105, %121 : vector<16x128xf32>
    %cst_45 = arith.constant 9.99999974E-6 : f32
    %123 = vector.broadcast %cst_45 : f32 to vector<16x1xf32>
    %124 = arith.addf %120, %123 : vector<16x1xf32>
    %125 = math.rsqrt %124 : vector<16x1xf32>
    %126 = vector.broadcast %125 : vector<16x1xf32> to vector<16x128xf32>
    %127 = arith.mulf %122, %126 : vector<16x128xf32>
    %128 = vector.broadcast %107 : vector<1x128xf32> to vector<16x128xf32>
    %129 = arith.mulf %127, %128 : vector<16x128xf32>
    %130 = vector.broadcast %109 : vector<1x128xf32> to vector<16x128xf32>
    %131 = arith.addf %129, %130 : vector<16x128xf32>
    %c0_46 = arith.constant 0 : index
    %c0_47 = arith.constant 0 : index
    %132 = vector.load %arg9[%c0_46, %c0_47] : memref<16x128xf32, #tpu.memory_space<vmem>>, vector<16x128xf32>
    tpu.vector_store %arg9[%c0_46, %c0_47], %131 {strides = array<i32>} : memref<16x128xf32, #tpu.memory_space<vmem>>, vector<16x128xf32>,
    %c1_i32 = arith.constant 1 : i32
    %133 = arith.cmpi eq, %arg0, %c1_i32 : i32
    %134 = arith.extui %133 : i1 to i32
    %c0_i32_48 = arith.constant 0 : i32
    %135 = arith.cmpi ne, %134, %c0_i32_48 : i32
    scf.if %135 {
      %136 = vector.shape_cast %131 : vector<16x128xf32> to vector<2x8x128xf32>
      %cst_49 = arith.constant dense<0.000000e+00> : vector<2x128xf32>
      %137 = vector.multi_reduction <add>, %136, %cst_49 [1] : vector<2x8x128xf32> to vector<2x128xf32>
      %cst_50 = arith.constant 8.000000e+00 : f32
      %138 = vector.broadcast %cst_50 : f32 to vector<2x128xf32>
      %139 = arith.divf %137, %138 : vector<2x128xf32>
      %140 = arith.truncf %139 : vector<2x128xf32> to vector<2x128xbf16>
      %c0_51 = arith.constant 0 : index
      %c0_52 = arith.constant 0 : index
      %141 = vector.load %arg6[%c0_51, %c0_52] : memref<128x128xbf16, #tpu.memory_space<vmem>>, vector<128x128xbf16>
      %cst_53 = arith.constant dense<0.000000e+00> : vector<2x128xf32>
      %142 = tpu.matmul %140, %141, %cst_53 {dimension_numbers = #tpu.dot_dimension_numbers<[1], [0], [0], [1], [0, 0, 1, 1], [], []>} : vector<2x128xbf16>, vector<128x128xbf16>, vector<2x128xf32> -> vector<2x128xf32>
      %c0_54 = arith.constant 0 : index
      %c0_55 = arith.constant 0 : index
      %143 = vector.load %arg7[%c0_54, %c0_55] : memref<1x128xf32, #tpu.memory_space<vmem>>, vector<1x128xf32>
      %144 = vector.broadcast %143 : vector<1x128xf32> to vector<2x128xf32>
      %145 = arith.addf %142, %144 : vector<2x128xf32>
      %c0_56 = arith.constant 0 : index
      %c0_57 = arith.constant 0 : index
      %146 = vector.load %arg8[%c0_56, %c0_57] : memref<2x128xf32, #tpu.memory_space<vmem>>, vector<2x128xf32>
      tpu.vector_store %arg8[%c0_56, %c0_57], %145 {strides = array<i32>} : memref<2x128xf32, #tpu.memory_space<vmem>>, vector<2x128xf32>,
    } else {
    }
    return
  }
  func.func @transform_0(%arg0: i32) -> (i32, i32, i32) {
    %c0_i32 = arith.constant 0 : i32
    %c0_i32_0 = arith.constant 0 : i32
    %c0_i32_1 = arith.constant 0 : i32
    %c0_i32_2 = arith.constant 0 : i32
    return %c0_i32, %c0_i32_0, %c0_i32_1 : i32, i32, i32
  }
  func.func @transform_1(%arg0: i32) -> (i32, i32, i32) {
    %c0_i32 = arith.constant 0 : i32
    %c0_i32_0 = arith.constant 0 : i32
    %c0_i32_1 = arith.constant 0 : i32
    return %arg0, %c0_i32, %c0_i32_0 : i32, i32, i32
  }
  func.func @transform_2(%arg0: i32) -> (i32, i32, i32) {
    %c0_i32 = arith.constant 0 : i32
    %c0_i32_0 = arith.constant 0 : i32
    %c0_i32_1 = arith.constant 0 : i32
    return %arg0, %c0_i32, %c0_i32_0 : i32, i32, i32
  }
  func.func @transform_3(%arg0: i32) -> (i32, i32, i32) {
    %c0_i32 = arith.constant 0 : i32
    %c0_i32_0 = arith.constant 0 : i32
    %c0_i32_1 = arith.constant 0 : i32
    return %arg0, %c0_i32, %c0_i32_0 : i32, i32, i32
  }
  func.func @transform_4(%arg0: i32) -> (i32, i32) {
    %c0_i32 = arith.constant 0 : i32
    %c0_i32_0 = arith.constant 0 : i32
    %c0_i32_1 = arith.constant 0 : i32
    return %c0_i32, %c0_i32_0 : i32, i32
  }
  func.func @transform_5(%arg0: i32) -> (i32, i32) {
    %c0_i32 = arith.constant 0 : i32
    %c0_i32_0 = arith.constant 0 : i32
    %c0_i32_1 = arith.constant 0 : i32
    return %c0_i32, %c0_i32_0 : i32, i32
  }
  func.func @transform_6(%arg0: i32) -> (i32, i32) {
    %c0_i32 = arith.constant 0 : i32
    %c0_i32_0 = arith.constant 0 : i32
    %c0_i32_1 = arith.constant 0 : i32
    return %c0_i32, %c0_i32_0 : i32, i32
  }
  func.func @transform_7(%arg0: i32) -> (i32, i32) {
    %c0_i32 = arith.constant 0 : i32
    %c0_i32_0 = arith.constant 0 : i32
    %c0_i32_1 = arith.constant 0 : i32
    return %c0_i32, %c0_i32_0 : i32, i32
  }
}

</mosaic_0001>

<llo_original>
// kernel: transformer_model.1
$region0: #{transformer_model.1}
  #allocation0 [shape = 'u32[]', space=smem, size = 0x4, offset = 0x4, fixed_abs, tag = 'smem constant byte address 0x4 - core index']
  #allocation1 [shape = 'u32[144,128]{1,0:T(1,128)}', space=vmem, size = 0x12000, scoped, tag = 'internal scratch']
  #allocation2 [shape = 'f32[16,128]{1,0:T(8,128)}', space=vmem, size = 0x2000, scoped, tag = 'scratch operand']
  %s0 = inlined_call_operand.vmem [shape: bf16[2,8,128], index: 0, kind: input, shape index: {}]
  %s1 = inlined_call_operand.hbm [shape: bf16[2,128,768], index: 1, kind: input, shape index: {}]
  %s2 = inlined_call_operand.hbm [shape: f32[2,1,384], index: 2, kind: input, shape index: {}]
  %s3 = inlined_call_operand.vmem [shape: f32[2,7,128], index: 3, kind: input, shape index: {}]
  %s4 = inlined_call_operand.hbm [shape: f32[128,128], index: 4, kind: input, shape index: {}]
  %s5 = inlined_call_operand.hbm [shape: bf16[128,128], index: 5, kind: input, shape index: {}]
  %s6 = inlined_call_operand.hbm [shape: f32[1,128], index: 6, kind: input, shape index: {}]
  %s7 = inlined_call_operand.hbm [shape: f32[2,128], index: 7, kind: output, shape index: {}]
  %s8 = sld [smem:[#allocation0]]
  $region89: #{transformer_model.1} parent=0
    _
  %s10 = ssub.s32 1, %s8
  %s11 = scalar_select 0, %s10, %s8
  $region1: #{transformer_model.1} parent=0
    #allocation3 [shape = 'u8[393216]{0}', space=vmem, size = 0x60000, scoped, tag = 'input window, operand 1']
    #allocation4 [shape = 's32[2]{0}', space=sflag, size = 0x8, scoped, tag = 'scoped memory for transformer_model.1']
    #allocation5 [shape = 's32[2]{0}', space=sflag, size = 0x8, scoped, tag = 'scoped memory for transformer_model.1']
    #allocation6 [shape = 'u8[3072]{0}', space=vmem, size = 0xc00, scoped, tag = 'input window, operand 2']
    #allocation7 [shape = 's32[2]{0}', space=sflag, size = 0x8, scoped, tag = 'scoped memory for transformer_model.1']
    #allocation8 [shape = 'u8[65536]{0}', space=vmem, size = 0x10000, scoped, tag = 'input window, operand 4, single buffered']
    #allocation9 [shape = 'u8[32768]{0}', space=vmem, size = 0x8000, scoped, tag = 'input window, operand 5, single buffered']
    #allocation10 [shape = 's32[1]{0}', space=sflag, size = 0x4, scoped, tag = 'scoped memory for transformer_model.1']
    #allocation11 [shape = 'u8[512]{0}', space=vmem, size = 0x400, scoped, tag = 'input window, operand 6, single buffered']
    #allocation12 [shape = 'u8[1024]{0}', space=vmem, size = 0x400, scoped, tag = 'output window, operand 0, single buffered']
    %12 = vsyncpa [#allocation4], 0
    %s13 = scalar_lea.sflag [#allocation4], 1
    %14 = vsyncpa %s13, 0
    %15 = vsyncpa [#allocation7], 0
    %s16 = scalar_lea.sflag [#allocation7], 1
    %17 = vsyncpa %s16, 0
    %18 = vsyncpa [#allocation10], 0
    %19 = vsyncpa [#allocation5], 0
    loop: start=0, step=1, limit=4
    $region2: #{transformer_model.1} parent=1 // loop_pre_header
      _
    $region3: #{transformer_model.1} parent=1 // loop_header
      %s21 = sphi 0, %s25
      %p22 = scmp.ge.s32.totalorder %s21, 4
      %s29 = sphi 0, %s29
      %s31 = sphi 0, %s29
      %s32 = sphi 0, %s31
      %s46 = sphi 0, %s32
      %s52 = sphi 0, %s54
      %s55 = sphi 0, %s52
      %s56 = sphi 0, %s55
      %s72 = sphi 0, %s56
      %s78 = sphi 0, %s80
      %s81 = sphi 0, %s78
      %s82 = sphi 0, %s81
      %s98 = sphi 0, %s82
      %s104 = sphi 0, %s106
      %s107 = sphi 0, %s104
      %s108 = sphi 0, %s107
      %s124 = sphi 0, %s108
      %s128 = sphi 0, %s128
      %s130 = sphi 0, %s128
      %s131 = sphi 0, %s130
      %s145 = sphi 0, %s131
      %s149 = sphi 0, %s149
      %s151 = sphi 0, %s149
      %s152 = sphi 0, %s151
      %s166 = sphi 0, %s152
      %s170 = sphi 0, %s170
      %s172 = sphi 0, %s170
      %s173 = sphi 0, %s172
      %s187 = sphi 0, %s173
      %s191 = sphi 0, %s191
      %s193 = sphi 0, %s191
      %s194 = sphi 0, %s193
      %s208 = sphi 0, %s194
    $region4: #{transformer_model.1} parent=1 // loop_header_branch
      %24 = sbr.rel (%p22) target = $region8
    $region5: #{transformer_model.1} parent=1 // loop_body
      %s26 = ssub.s32 %s21, 1
      %s27 = ssub.s32 %s21, 2
      %s28 = sadd.s32 %s21, 1
      %s30 = sadd.s32 %s29, 1
      %p33 = scmp.eq.s32.totalorder %s21, 1
      %p34 = scmp.ne.s32.totalorder %s29, %s31
      %p35 = scmp.eq.s32.totalorder %s21, 0
      %p36 = por %p34, %p35
      %p37 = scmp.ne.s32.totalorder %s29, %s31
      %p38 = scmp.eq.s32.totalorder %s26, 1
      %p39 = por %p37, %p38
      %p40 = scmp.ne.s32.totalorder %s31, %s32
      %p41 = scmp.eq.s32.totalorder %s26, 0
      %p42 = por %p40, %p41
      %p43 = scmp.ne.s32.totalorder %s31, %s32
      %p44 = scmp.eq.s32.totalorder %s27, 1
      %p45 = por %p43, %p44
      %p47 = scmp.ne.s32.totalorder %s32, %s46
      %p48 = scmp.eq.s32.totalorder %s27, 0
      %p49 = por %p47, %p48
      %s50 = ssub.s32 %s21, %s28
      %p51 = scmp.eq.s32.totalorder %s50, 0
      %s53 = sadd.s32 %s52, 1
      %s54 = scalar_select %p51, %s52, %s53
      %p57 = pneg %p51
      %p58 = scmp.eq.s32.totalorder %s21, 1
      %p59 = por %p57, %p58
      %p60 = scmp.ne.s32.totalorder %s52, %s55
      %p61 = scmp.eq.s32.totalorder %s21, 0
      %p62 = por %p60, %p61
      %p63 = scmp.ne.s32.totalorder %s52, %s55
      %p64 = scmp.eq.s32.totalorder %s26, 1
      %p65 = por %p63, %p64
      %p66 = scmp.ne.s32.totalorder %s55, %s56
      %p67 = scmp.eq.s32.totalorder %s26, 0
      %p68 = por %p66, %p67
      %p69 = scmp.ne.s32.totalorder %s55, %s56
      %p70 = scmp.eq.s32.totalorder %s27, 1
      %p71 = por %p69, %p70
      %p73 = scmp.ne.s32.totalorder %s56, %s72
      %p74 = scmp.eq.s32.totalorder %s27, 0
      %p75 = por %p73, %p74
      %s76 = ssub.s32 %s21, %s28
      %p77 = scmp.eq.s32.totalorder %s76, 0
      %s79 = sadd.s32 %s78, 1
      %s80 = scalar_select %p77, %s78, %s79
      %p83 = pneg %p77
      %p84 = scmp.eq.s32.totalorder %s21, 1
      %p85 = por %p83, %p84
      %p86 = scmp.ne.s32.totalorder %s78, %s81
      %p87 = scmp.eq.s32.totalorder %s21, 0
      %p88 = por %p86, %p87
      %p89 = scmp.ne.s32.totalorder %s78, %s81
      %p90 = scmp.eq.s32.totalorder %s26, 1
      %p91 = por %p89, %p90
      %p92 = scmp.ne.s32.totalorder %s81, %s82
      %p93 = scmp.eq.s32.totalorder %s26, 0
      %p94 = por %p92, %p93
      %p95 = scmp.ne.s32.totalorder %s81, %s82
      %p96 = scmp.eq.s32.totalorder %s27, 1
      %p97 = por %p95, %p96
      %p99 = scmp.ne.s32.totalorder %s82, %s98
      %p100 = scmp.eq.s32.totalorder %s27, 0
      %p101 = por %p99, %p100
      %s102 = ssub.s32 %s21, %s28
      %p103 = scmp.eq.s32.totalorder %s102, 0
      %s105 = sadd.s32 %s104, 1
      %s106 = scalar_select %p103, %s104, %s105
      %p109 = pneg %p103
      %p110 = scmp.eq.s32.totalorder %s21, 1
      %p111 = por %p109, %p110
      %p112 = scmp.ne.s32.totalorder %s104, %s107
      %p113 = scmp.eq.s32.totalorder %s21, 0
      %p114 = por %p112, %p113
      %p115 = scmp.ne.s32.totalorder %s104, %s107
      %p116 = scmp.eq.s32.totalorder %s26, 1
      %p117 = por %p115, %p116
      %p118 = scmp.ne.s32.totalorder %s107, %s108
      %p119 = scmp.eq.s32.totalorder %s26, 0
      %p120 = por %p118, %p119
      %p121 = scmp.ne.s32.totalorder %s107, %s108
      %p122 = scmp.eq.s32.totalorder %s27, 1
      %p123 = por %p121, %p122
      %p125 = scmp.ne.s32.totalorder %s108, %s124
      %p126 = scmp.eq.s32.totalorder %s27, 0
      %p127 = por %p125, %p126
      %s129 = sadd.s32 %s128, 1
      %p132 = scmp.eq.s32.totalorder %s21, 1
      %p133 = scmp.ne.s32.totalorder %s128, %s130
      %p134 = scmp.eq.s32.totalorder %s21, 0
      %p135 = por %p133, %p134
      %p136 = scmp.ne.s32.totalorder %s128, %s130
      %p137 = scmp.eq.s32.totalorder %s26, 1
      %p138 = por %p136, %p137
      %p139 = scmp.ne.s32.totalorder %s130, %s131
      %p140 = scmp.eq.s32.totalorder %s26, 0
      %p141 = por %p139, %p140
      %p142 = scmp.ne.s32.totalorder %s130, %s131
      %p143 = scmp.eq.s32.totalorder %s27, 1
      %p144 = por %p142, %p143
      %p146 = scmp.ne.s32.totalorder %s131, %s145
      %p147 = scmp.eq.s32.totalorder %s27, 0
      %p148 = por %p146, %p147
      %s150 = sadd.s32 %s149, 1
      %p153 = scmp.eq.s32.totalorder %s21, 1
      %p154 = scmp.ne.s32.totalorder %s149, %s151
      %p155 = scmp.eq.s32.totalorder %s21, 0
      %p156 = por %p154, %p155
      %p157 = scmp.ne.s32.totalorder %s149, %s151
      %p158 = scmp.eq.s32.totalorder %s26, 1
      %p159 = por %p157, %p158
      %p160 = scmp.ne.s32.totalorder %s151, %s152
      %p161 = scmp.eq.s32.totalorder %s26, 0
      %p162 = por %p160, %p161
      %p163 = scmp.ne.s32.totalorder %s151, %s152
      %p164 = scmp.eq.s32.totalorder %s27, 1
      %p165 = por %p163, %p164
      %p167 = scmp.ne.s32.totalorder %s152, %s166
      %p168 = scmp.eq.s32.totalorder %s27, 0
      %p169 = por %p167, %p168
      %s171 = sadd.s32 %s170, 1
      %p174 = scmp.eq.s32.totalorder %s21, 1
      %p175 = scmp.ne.s32.totalorder %s170, %s172
      %p176 = scmp.eq.s32.totalorder %s21, 0
      %p177 = por %p175, %p176
      %p178 = scmp.ne.s32.totalorder %s170, %s172
      %p179 = scmp.eq.s32.totalorder %s26, 1
      %p180 = por %p178, %p179
      %p181 = scmp.ne.s32.totalorder %s172, %s173
      %p182 = scmp.eq.s32.totalorder %s26, 0
      %p183 = por %p181, %p182
      %p184 = scmp.ne.s32.totalorder %s172, %s173
      %p185 = scmp.eq.s32.totalorder %s27, 1
      %p186 = por %p184, %p185
      %p188 = scmp.ne.s32.totalorder %s173, %s187
      %p189 = scmp.eq.s32.totalorder %s27, 0
      %p190 = por %p188, %p189
      %s192 = sadd.s32 %s191, 1
      %p195 = scmp.eq.s32.totalorder %s21, 1
      %p196 = scmp.ne.s32.totalorder %s191, %s193
      %p197 = scmp.eq.s32.totalorder %s21, 0
      %p198 = por %p196, %p197
      %p199 = scmp.ne.s32.totalorder %s191, %s193
      %p200 = scmp.eq.s32.totalorder %s26, 1
      %p201 = por %p199, %p200
      %p202 = scmp.ne.s32.totalorder %s193, %s194
      %p203 = scmp.eq.s32.totalorder %s26, 0
      %p204 = por %p202, %p203
      %p205 = scmp.ne.s32.totalorder %s193, %s194
      %p206 = scmp.eq.s32.totalorder %s27, 1
      %p207 = por %p205, %p206
      %p209 = scmp.ne.s32.totalorder %s194, %s208
      %p210 = scmp.eq.s32.totalorder %s27, 0
      %p211 = por %p209, %p210
      %p212 = scmp.le.s32.totalorder 1, %s21
      %p213 = scmp.lt.s32.totalorder %s21, 3
      %p214 = pnand %p212, %p213
      %p215 = pneg %p214
      // Predicated region
      $region9: #{transformer_model.1} parent=5 // pred_check
        _
      $region10: #{transformer_model.1} parent=5 // pred_check_branch
        %217 = sbr.rel (%p214) target = $region12
      $region11: #{transformer_model.1} parent=5 // pred_region
        %s218 = ssub.s32 %s21, 1
        // Predicated region
        $region13: #{transformer_model.1} parent=11 // pred_check
          %p219 = pneg %p42
        $region14: #{transformer_model.1} parent=11 // pred_check_branch
          %221 = sbr.rel (%p219) target = $region16
        $region15: #{transformer_model.1} parent=11 // pred_region
          _
        $region16: #{transformer_model.1} parent=11 // pred_fallthru
          _
        // Predicated region
        $region17: #{transformer_model.1} parent=11 // pred_check
          %p222 = pneg %p141
        $region18: #{transformer_model.1} parent=11 // pred_check_branch
          %224 = sbr.rel (%p222) target = $region20
        $region19: #{transformer_model.1} parent=11 // pred_region
          %s226 = ssub.s32 2048, 2048
          %227 = vsyncadd [#allocation7], %s226
          %s228 = sshll.u32 [#allocation8], 4
          %s229 = int_to_ptr.vmem [resolvable:$true] %s228
          %234 = dma.hbm_to_vmem [thread:$0]  %s4, 2048, %s229, [#allocation7], 128, 128, 8
        $region20: #{transformer_model.1} parent=11 // pred_fallthru
          _
        // Predicated region
        $region21: #{transformer_model.1} parent=11 // pred_check
          %p235 = pneg %p162
        $region22: #{transformer_model.1} parent=11 // pred_check_branch
          %237 = sbr.rel (%p235) target = $region24
        $region23: #{transformer_model.1} parent=11 // pred_region
          %s239 = ssub.s32 1024, 1024
          %240 = vsyncadd [#allocation10], %s239
          %s241 = sshll.u32 [#allocation9], 4
          %s242 = int_to_ptr.vmem [resolvable:$true] %s241
          %247 = dma.hbm_to_vmem [thread:$0]  %s5, 1024, %s242, [#allocation10], 64, 64, 4
        $region24: #{transformer_model.1} parent=11 // pred_fallthru
          _
        // Predicated region
        $region25: #{transformer_model.1} parent=11 // pred_check
          %p248 = pneg %p183
        $region26: #{transformer_model.1} parent=11 // pred_check_branch
          %250 = sbr.rel (%p248) target = $region28
        $region27: #{transformer_model.1} parent=11 // pred_region
          %s252 = ssub.s32 16, 16
          %253 = vsyncadd [#allocation10], %s252
          %s255 = sshll.u32 [#allocation11], 4
          %s256 = int_to_ptr.vmem [resolvable:$true] %s255
          %258 = dma.hbm_to_vmem [thread:$0]  %s6, 16, %s256, [#allocation10]
        $region28: #{transformer_model.1} parent=11 // pred_fallthru
          _
      $region12: #{transformer_model.1} parent=5 // pred_fallthru
        _
      %p259 = scmp.lt.s32.totalorder %s21, 2
      // Predicated region
      $region29: #{transformer_model.1} parent=5 // pred_check
        %p260 = pneg %p259
      $region30: #{transformer_model.1} parent=5 // pred_check_branch
        %262 = sbr.rel (%p260) target = $region32
      $region31: #{transformer_model.1} parent=5 // pred_region
        // Predicated region
        $region33: #{transformer_model.1} parent=31 // pred_check
          %p263 = pneg %p62
        $region34: #{transformer_model.1} parent=31 // pred_check_branch
          %265 = sbr.rel (%p263) target = $region36
        $region35: #{transformer_model.1} parent=31 // pred_region
          %s266 = sand.u32 %s52, 1
          %s267 = scalar_lea.sflag [#allocation4], %s266
          %s268 = sand.u32 %s52, 1
          %s269 = smul.addr %s268, 384
          %s270 = scalar_lea.vmem [#allocation3], %s269
          %s272 = ssub.s32 6144, 6144
          %273 = vsyncadd %s267, %s272
          %s274 = smul.addr %s21, 96
          %s275 = smul.addr %s274, 64
          %s276 = scalar_lea.hbm %s1, %s275
          %s277 = sshll.u32 %s270, 4
          %s278 = int_to_ptr.vmem [resolvable:$true] %s277
          %283 = dma.hbm_to_vmem [thread:$0]  %s276, 6144, %s278, %s267, 384, 384, 24
        $region36: #{transformer_model.1} parent=31 // pred_fallthru
          _
        // Predicated region
        $region37: #{transformer_model.1} parent=31 // pred_check
          %p284 = pneg %p88
        $region38: #{transformer_model.1} parent=31 // pred_check_branch
          %286 = sbr.rel (%p284) target = $region40
        $region39: #{transformer_model.1} parent=31 // pred_region
          %s287 = sand.u32 %s21, 1
          %s288 = scalar_lea.sflag [#allocation7], %s287
          %s289 = sand.u32 %s78, 1
          %s290 = smul.addr %s289, 3
          %s291 = scalar_lea.vmem [#allocation6], %s290
          %s293 = ssub.s32 48, 48
          %294 = vsyncadd %s288, %s293
          %s295 = smul.addr %s21, 3
          %s296 = smul.addr %s295, 16
          %s297 = scalar_lea.hbm %s2, %s296
          %s299 = sshll.u32 %s291, 4
          %s300 = int_to_ptr.vmem [resolvable:$true] %s299
          %302 = dma.hbm_to_vmem [thread:$0]  %s297, 48, %s300, %s288
        $region40: #{transformer_model.1} parent=31 // pred_fallthru
          _
        // Predicated region
        $region41: #{transformer_model.1} parent=31 // pred_check
          %p303 = pneg %p114
        $region42: #{transformer_model.1} parent=31 // pred_check_branch
          %305 = sbr.rel (%p303) target = $region44
        $region43: #{transformer_model.1} parent=31 // pred_region
          %p306 = scmp.lt.s32.totalorder %s21, 1
          %s307 = scalar_select %p306, %s21, 1
          %s308 = smul.addr %s307, 8
          %s309 = scalar_lea.vmem %s3, %s308
        $region44: #{transformer_model.1} parent=31 // pred_fallthru
          _
      $region32: #{transformer_model.1} parent=5 // pred_fallthru
        _
      %p310 = scmp.le.s32.totalorder 1, %s21
      %p311 = scmp.lt.s32.totalorder %s21, 3
      %p312 = pnand %p310, %p311
      %p313 = pneg %p312
      // Predicated region
      $region45: #{transformer_model.1} parent=5 // pred_check
        _
      $region46: #{transformer_model.1} parent=5 // pred_check_branch
        %315 = sbr.rel (%p312) target = $region48
      $region47: #{transformer_model.1} parent=5 // pred_region
        %s316 = ssub.s32 %s21, 1
        %s317 = sand.u32 %s55, 1
        %s318 = scalar_lea.sflag [#allocation4], %s317
        %s319 = sand.u32 %s55, 1
        %s320 = smul.addr %s319, 384
        %s321 = scalar_lea.vmem [#allocation3], %s320
        // Predicated region
        $region49: #{transformer_model.1} parent=47 // pred_check
          %p322 = pneg %p68
        $region50: #{transformer_model.1} parent=47 // pred_check_branch
          %324 = sbr.rel (%p322) target = $region52
        $region51: #{transformer_model.1} parent=47 // pred_region
          %325 = dma.done %s318, 6144
        $region52: #{transformer_model.1} parent=47 // pred_fallthru
          _
        %s326 = sand.u32 %s26, 1
        %s327 = scalar_lea.sflag [#allocation7], %s326
        %s328 = sand.u32 %s81, 1
        %s329 = smul.addr %s328, 3
        %s330 = scalar_lea.vmem [#allocation6], %s329
        // Predicated region
        $region53: #{transformer_model.1} parent=47 // pred_check
          %p331 = pneg %p94
        $region54: #{transformer_model.1} parent=47 // pred_check_branch
          %333 = sbr.rel (%p331) target = $region56
        $region55: #{transformer_model.1} parent=47 // pred_region
          %334 = dma.done %s327, 48
        $region56: #{transformer_model.1} parent=47 // pred_fallthru
          _
        // Predicated region
        $region57: #{transformer_model.1} parent=47 // pred_check
          %p335 = pneg %p141
        $region58: #{transformer_model.1} parent=47 // pred_check_branch
          %337 = sbr.rel (%p335) target = $region60
        $region59: #{transformer_model.1} parent=47 // pred_region
          %338 = dma.done [#allocation7], 2048
        $region60: #{transformer_model.1} parent=47 // pred_fallthru
          _
        // Predicated region
        $region61: #{transformer_model.1} parent=47 // pred_check
          %p339 = pneg %p162
        $region62: #{transformer_model.1} parent=47 // pred_check_branch
          %341 = sbr.rel (%p339) target = $region64
        $region63: #{transformer_model.1} parent=47 // pred_region
          %342 = dma.done [#allocation10], 1024
        $region64: #{transformer_model.1} parent=47 // pred_fallthru
          _
        // Predicated region
        $region65: #{transformer_model.1} parent=47 // pred_check
          %p343 = pneg %p183
        $region66: #{transformer_model.1} parent=47 // pred_check_branch
          %345 = sbr.rel (%p343) target = $region68
        $region67: #{transformer_model.1} parent=47 // pred_region
          %346 = dma.done [#allocation10], 16
        $region68: #{transformer_model.1} parent=47 // pred_fallthru
          _
        %p347 = pneg %p42
        %p348 = pneg %p39
        %s349 = sand.u32 %s55, 1
        %s350 = scalar_lea.sflag [#allocation4], %s349
        %s351 = sand.u32 %s55, 1
        %s352 = smul.addr %s351, 384
        %s353 = scalar_lea.vmem [#allocation3], %s352
        %p354 = pneg %p68
        %p355 = pneg %p65
        %s356 = sand.u32 %s26, 1
        %s357 = scalar_lea.sflag [#allocation7], %s356
        %s358 = sand.u32 %s81, 1
        %s359 = smul.addr %s358, 3
        %s360 = scalar_lea.vmem [#allocation6], %s359
        %p361 = pneg %p94
        %p362 = pneg %p91
        %p363 = scmp.lt.s32.totalorder %s26, 1
        %s364 = scalar_select %p363, %s26, 1
        %s365 = smul.addr %s364, 8
        %s366 = scalar_lea.vmem %s3, %s365
        %p367 = pneg %p120
        %p368 = pneg %p117
        %p369 = pneg %p141
        %p370 = pneg %p138
        %p371 = pneg %p162
        %p372 = pneg %p159
        %p373 = pneg %p183
        %p374 = pneg %p180
        %p375 = pneg %p204
        %p376 = pneg %p201
        %p377 = scmp.lt.s32.totalorder %s26, 1
        %s378 = scalar_select %p377, %s26, 1
        %s379 = smul.addr %s378, 8
        %s380 = scalar_lea.vmem %s3, %s379
        %p382 = scmp.eq.s32.totalorder %s26, 0
        // Predicated region
        $region69: #{transformer_model.1} parent=47 // pred_check
          %p383 = pneg %p382
        $region70: #{transformer_model.1} parent=47 // pred_check_branch
          %385 = sbr.rel (%p383) target = $region72
        $region71: #{transformer_model.1} parent=47 // pred_region
          %v386 = vld [vmem:[%s0] sm:$0xf]
          %v387 = vld [vmem:[%s0 + $0x4] sm:$0xf]
          %v388 = vunpack.c.l.bf16 %v386
          %v389 = vunpack.c.l.bf16 %v387
          %390 = vst [vmem:[#allocation2] sm:$0xff] %v388
          %391 = vst [vmem:[#allocation2 + $0x8] sm:$0xff] %v389
        $region72: #{transformer_model.1} parent=47 // pred_fallthru
          _
        %v392 = vld [vmem:[#allocation2] sm:$0xff]
        %v393 = vld [vmem:[#allocation2 + $0x8] sm:$0xff]
        %v394 = vpack.c.bf16 %v393, %v392
        %v395 = vld [vmem:[%s321] sm:$0xff]
        %v396 = vld [vmem:[%s321 + $0x8] sm:$0xf]
        %v397 = vld [vmem:[%s321 + $0x18] sm:$0xff]
        %v398 = vld [vmem:[%s321 + $0x20] sm:$0xf]
        %v399 = vld [vmem:[%s321 + $0x30] sm:$0xff]
        %v400 = vld [vmem:[%s321 + $0x38] sm:$0xf]
        %v401 = vld [vmem:[%s321 + $0x48] sm:$0xff]
        %v402 = vld [vmem:[%s321 + $0x50] sm:$0xf]
        %v403 = vld [vmem:[%s321 + $0x60] sm:$0xff]
        %v404 = vld [vmem:[%s321 + $0x68] sm:$0xf]
        %v405 = vld [vmem:[%s321 + $0x78] sm:$0xff]
        %v406 = vld [vmem:[%s321 + $0x80] sm:$0xf]
        %v407 = vld [vmem:[%s321 + $0x90] sm:$0xff]
        %v408 = vld [vmem:[%s321 + $0x98] sm:$0xf]
        %v409 = vld [vmem:[%s321 + $0xa8] sm:$0xff]
        %v410 = vld [vmem:[%s321 + $0xb0] sm:$0xf]
        %v411 = vld [vmem:[%s321 + $0xc0] sm:$0xff]
        %v412 = vld [vmem:[%s321 + $0xc8] sm:$0xf]
        %v413 = vld [vmem:[%s321 + $0xd8] sm:$0xff]
        %v414 = vld [vmem:[%s321 + $0xe0] sm:$0xf]
        %v415 = vld [vmem:[%s321 + $0xf0] sm:$0xff]
        %v416 = vld [vmem:[%s321 + $0xf8] sm:$0xf]
        %v417 = vld [vmem:[%s321 + $0x108] sm:$0xff]
        %v418 = vld [vmem:[%s321 + $0x110] sm:$0xf]
        %v419 = vld [vmem:[%s321 + $0x120] sm:$0xff]
        %v420 = vld [vmem:[%s321 + $0x128] sm:$0xf]
        %v421 = vld [vmem:[%s321 + $0x138] sm:$0xff]
        %v422 = vld [vmem:[%s321 + $0x140] sm:$0xf]
        %v423 = vld [vmem:[%s321 + $0x150] sm:$0xff]
        %v424 = vld [vmem:[%s321 + $0x158] sm:$0xf]
        %v425 = vld [vmem:[%s321 + $0x168] sm:$0xff]
        %v426 = vld [vmem:[%s321 + $0x170] sm:$0xf]
        %v427 = vld [vmem:[%s330] sm:$0x7]
        %v429 = vlaneseq
        %v430 = vshrl.u32 %v429, 7
        %v431 = vsub.s32 0, %v430
        %v432 = vrot.slane %v427, %v431
        %v433 = vlaneseq
        %v434 = vshrl.u32 %v433, 7
        %v435 = vsub.s32 1, %v434
        %v436 = vrot.slane %v427, %v435
        %v437 = vlaneseq
        %v438 = vshrl.u32 %v437, 7
        %v439 = vsub.s32 2, %v438
        %v440 = vrot.slane %v427, %v439
        %v476 = vunpack.c.l.b16 %v395
        %v477 = vunpack.c.h.b16 %v395
        %v478 = vunpack.c.l.b16 %v396
        %v479 = vunpack.c.l.b16 %v397
        %v480 = vunpack.c.h.b16 %v397
        %v481 = vunpack.c.l.b16 %v398
        %v482 = vunpack.c.l.b16 %v399
        %v483 = vunpack.c.h.b16 %v399
        %v484 = vunpack.c.l.b16 %v400
        %v485 = vunpack.c.l.b16 %v401
        %v486 = vunpack.c.h.b16 %v401
        %v487 = vunpack.c.l.b16 %v402
        %v488 = vunpack.c.l.b16 %v403
        %v489 = vunpack.c.h.b16 %v403
        %v490 = vunpack.c.l.b16 %v404
        %v491 = vunpack.c.l.b16 %v405
        %v492 = vunpack.c.h.b16 %v405
        %v493 = vunpack.c.l.b16 %v406
        %v494 = vunpack.c.l.b16 %v407
        %v495 = vunpack.c.h.b16 %v407
        %v496 = vunpack.c.l.b16 %v408
        %v497 = vunpack.c.l.b16 %v409
        %v498 = vunpack.c.h.b16 %v409
        %v499 = vunpack.c.l.b16 %v410
        %v500 = vunpack.c.l.b16 %v411
        %v501 = vunpack.c.h.b16 %v411
        %v502 = vunpack.c.l.b16 %v412
        %v503 = vunpack.c.l.b16 %v413
        %v504 = vunpack.c.h.b16 %v413
        %v505 = vunpack.c.l.b16 %v414
        %v506 = vunpack.c.l.b16 %v415
        %v507 = vunpack.c.h.b16 %v415
        %v508 = vunpack.c.l.b16 %v416
        %v509 = vunpack.c.l.b16 %v417
        %v510 = vunpack.c.h.b16 %v417
        %v511 = vunpack.c.l.b16 %v418
        %v512 = vunpack.c.l.b16 %v419
        %v513 = vunpack.c.h.b16 %v419
        %v514 = vunpack.c.l.b16 %v420
        %v515 = vunpack.c.l.b16 %v421
        %v516 = vunpack.c.h.b16 %v421
        %v517 = vunpack.c.l.b16 %v422
        %v518 = vunpack.c.l.b16 %v423
        %v519 = vunpack.c.h.b16 %v423
        %v520 = vunpack.c.l.b16 %v424
        %v521 = vunpack.c.l.b16 %v425
        %v522 = vunpack.c.h.b16 %v425
        %v523 = vunpack.c.l.b16 %v426
        %v524 = vpack.c.b16 %v479, %v476
        %v525 = vpack.c.b16 %v480, %v477
        %v526 = vpack.c.b16 %v481, %v478
        %v527 = vpack.c.b16 %v485, %v482
        %v528 = vpack.c.b16 %v486, %v483
        %v529 = vpack.c.b16 %v487, %v484
        %v530 = vpack.c.b16 %v491, %v488
        %v531 = vpack.c.b16 %v492, %v489
        %v532 = vpack.c.b16 %v493, %v490
        %v533 = vpack.c.b16 %v497, %v494
        %v534 = vpack.c.b16 %v498, %v495
        %v535 = vpack.c.b16 %v499, %v496
        %v536 = vpack.c.b16 %v503, %v500
        %v537 = vpack.c.b16 %v504, %v501
        %v538 = vpack.c.b16 %v505, %v502
        %v539 = vpack.c.b16 %v509, %v506
        %v540 = vpack.c.b16 %v510, %v507
        %v541 = vpack.c.b16 %v511, %v508
        %v542 = vpack.c.b16 %v515, %v512
        %v543 = vpack.c.b16 %v516, %v513
        %v544 = vpack.c.b16 %v517, %v514
        %v545 = vpack.c.b16 %v521, %v518
        %v546 = vpack.c.b16 %v522, %v519
        %v547 = vpack.c.b16 %v523, %v520
        %572 = vmatprep.subr.bf16.mxu0 %v525
        %573 = vmatpush1.bf16.msra.mxu0 %v524
        %574 = vmatprep.subr.bf16.mxu0 %v528
        %575 = vmatpush1.bf16.msra.mxu0 %v527
        %576 = vmatprep.subr.bf16.mxu0 %v531
        %577 = vmatpush1.bf16.msra.mxu0 %v530
        %578 = vmatprep.subr.bf16.mxu0 %v534
        %579 = vmatpush1.bf16.msra.mxu0 %v533
        %580 = vmatprep.subr.bf16.mxu0 %v537
        %581 = vmatpush1.bf16.msra.mxu0 %v536
        %582 = vmatprep.subr.bf16.mxu0 %v540
        %583 = vmatpush1.bf16.msra.mxu0 %v539
        %584 = vmatprep.subr.bf16.mxu0 %v543
        %585 = vmatpush1.bf16.msra.mxu0 %v542
        %586 = vmatprep.subr.bf16.mxu0 %v546
        %587 = vmatpush1.bf16.msra.mxu0 %v545
        %588 = vmatprep.subr.bf16.mxu0 0
        %589 = vmatpush1.bf16.msra.mxu0 0
        %590 = vmatprep.subr.bf16.mxu0 0
        %591 = vmatpush1.bf16.msra.mxu0 0
        %592 = vmatprep.subr.bf16.mxu0 0
        %593 = vmatpush1.bf16.msra.mxu0 0
        %594 = vmatprep.subr.bf16.mxu0 0
        %595 = vmatpush1.bf16.msra.mxu0 0
        %596 = vmatprep.subr.bf16.mxu0 0
        %597 = vmatpush1.bf16.msra.mxu0 0
        %598 = vmatprep.subr.bf16.mxu0 0
        %599 = vmatpush1.bf16.msra.mxu0 0
        %600 = vmatprep.subr.bf16.mxu0 0
        %601 = vmatpush1.bf16.msra.mxu0 0
        %602 = vmatprep.subr.bf16.mxu0 0
        %603 = vmatpush1.bf16.msra.mxu0 0
        %604 = vmatprep.mubr.bf16.mxu0 0
        %605 = vmatmul.mubr.bf16.gmra.mrb[0].mxu0 %v394
        %v606 = vpop.f32.mrb[0].mxu0
        %v607 = vadd.f32 %v432, %v606
        %v608 = vpop.f32.mrb[0].mxu0
        %v609 = vadd.f32 %v436, %v608
        %v610 = vpop.f32.mrb[0].mxu0
        %v611 = vadd.f32 %v432, %v610
        %v612 = vpop.f32.mrb[0].mxu0
        %v613 = vadd.f32 %v436, %v612
        %614 = vdwg.mxu0
        %615 = vmatprep.subr.bf16.mxu0 0
        %616 = vmatpush1.bf16.msra.mxu0 %v526
        %617 = vmatprep.subr.bf16.mxu0 0
        %618 = vmatpush1.bf16.msra.mxu0 %v529
        %619 = vmatprep.subr.bf16.mxu0 0
        %620 = vmatpush1.bf16.msra.mxu0 %v532
        %621 = vmatprep.subr.bf16.mxu0 0
        %622 = vmatpush1.bf16.msra.mxu0 %v535
        %623 = vmatprep.subr.bf16.mxu0 0
        %624 = vmatpush1.bf16.msra.mxu0 %v538
        %625 = vmatprep.subr.bf16.mxu0 0
        %626 = vmatpush1.bf16.msra.mxu0 %v541
        %627 = vmatprep.subr.bf16.mxu0 0
        %628 = vmatpush1.bf16.msra.mxu0 %v544
        %629 = vmatprep.subr.bf16.mxu0 0
        %630 = vmatpush1.bf16.msra.mxu0 %v547
        %631 = vmatprep.subr.bf16.mxu0 0
        %632 = vmatpush1.bf16.msra.mxu0 0
        %633 = vmatprep.subr.bf16.mxu0 0
        %634 = vmatpush1.bf16.msra.mxu0 0
        %635 = vmatprep.subr.bf16.mxu0 0
        %636 = vmatpush1.bf16.msra.mxu0 0
        %637 = vmatprep.subr.bf16.mxu0 0
        %638 = vmatpush1.bf16.msra.mxu0 0
        %639 = vmatprep.subr.bf16.mxu0 0
        %640 = vmatpush1.bf16.msra.mxu0 0
        %641 = vmatprep.subr.bf16.mxu0 0
        %642 = vmatpush1.bf16.msra.mxu0 0
        %643 = vmatprep.subr.bf16.mxu0 0
        %644 = vmatpush1.bf16.msra.mxu0 0
        %645 = vmatprep.subr.bf16.mxu0 0
        %646 = vmatpush1.bf16.msra.mxu0 0
        %647 = vmatprep.mubr.bf16.mxu0 0
        %648 = vmatmul.mubr.bf16.gmra.mrb[0].mxu0 %v394
        %v649 = vpop.f32.mrb[0].mxu0
        %v650 = vadd.f32 %v440, %v649
        %v651 = vpop.f32.mrb[0].mxu0
        %v652 = vpop.f32.mrb[0].mxu0
        %v653 = vadd.f32 %v440, %v652
        %v654 = vpop.f32.mrb[0].mxu0
        %655 = vdwg.mxu0
        %v656 = vmul.f32 %v607, %v609
        %v657 = vmul.f32 %v607, %v613
        %v658 = vmul.f32 %v611, %v609
        %v659 = vmul.f32 %v611, %v613
        %v660 = vld [vmem:[#allocation8] sm:$0xff]
        %v661 = vld [vmem:[#allocation8 + $0x8] sm:$0xff]
        %v662 = vld [vmem:[#allocation8 + $0x10] sm:$0xff]
        %v663 = vld [vmem:[#allocation8 + $0x18] sm:$0xff]
        %v664 = vld [vmem:[#allocation8 + $0x20] sm:$0xff]
        %v665 = vld [vmem:[#allocation8 + $0x28] sm:$0xff]
        %v666 = vld [vmem:[#allocation8 + $0x30] sm:$0xff]
        %v667 = vld [vmem:[#allocation8 + $0x38] sm:$0xff]
        %v668 = vld [vmem:[#allocation8 + $0x40] sm:$0xff]
        %v669 = vld [vmem:[#allocation8 + $0x48] sm:$0xff]
        %v670 = vld [vmem:[#allocation8 + $0x50] sm:$0xff]
        %v671 = vld [vmem:[#allocation8 + $0x58] sm:$0xff]
        %v672 = vld [vmem:[#allocation8 + $0x60] sm:$0xff]
        %v673 = vld [vmem:[#allocation8 + $0x68] sm:$0xff]
        %v674 = vld [vmem:[#allocation8 + $0x70] sm:$0xff]
        %v675 = vld [vmem:[#allocation8 + $0x78] sm:$0xff]
        %676 = vmatprep.subr.mxu0 0.0
        %677 = vmatpush1.msra.mxu0 %v660
        %678 = vmatprep.subr.mxu0 0.0
        %679 = vmatpush1.msra.mxu0 %v661
        %680 = vmatprep.subr.mxu0 0.0
        %681 = vmatpush1.msra.mxu0 %v662
        %682 = vmatprep.subr.mxu0 0.0
        %683 = vmatpush1.msra.mxu0 %v663
        %684 = vmatprep.subr.mxu0 0.0
        %685 = vmatpush1.msra.mxu0 %v664
        %686 = vmatprep.subr.mxu0 0.0
        %687 = vmatpush1.msra.mxu0 %v665
        %688 = vmatprep.subr.mxu0 0.0
        %689 = vmatpush1.msra.mxu0 %v666
        %690 = vmatprep.subr.mxu0 0.0
        %691 = vmatpush1.msra.mxu0 %v667
        %692 = vmatprep.subr.mxu0 0.0
        %693 = vmatpush1.msra.mxu0 %v668
        %694 = vmatprep.subr.mxu0 0.0
        %695 = vmatpush1.msra.mxu0 %v669
        %696 = vmatprep.subr.mxu0 0.0
        %697 = vmatpush1.msra.mxu0 %v670
        %698 = vmatprep.subr.mxu0 0.0
        %699 = vmatpush1.msra.mxu0 %v671
        %700 = vmatprep.subr.mxu0 0.0
        %701 = vmatpush1.msra.mxu0 %v672
        %702 = vmatprep.subr.mxu0 0.0
        %703 = vmatpush1.msra.mxu0 %v673
        %704 = vmatprep.subr.mxu0 0.0
        %705 = vmatpush1.msra.mxu0 %v674
        %706 = vmatprep.subr.mxu0 0.0
        %707 = vmatpush1.msra.mxu0 %v675
        %708 = vmatprep.subr.mxu0 0.0
        %709 = vmatpush1.msra.mxu0 0.0
        %710 = vmatprep.subr.mxu0 0.0
        %711 = vmatpush1.msra.mxu0 0.0
        %712 = vmatprep.subr.mxu0 0.0
        %713 = vmatpush1.msra.mxu0 0.0
        %714 = vmatprep.subr.mxu0 0.0
        %715 = vmatpush1.msra.mxu0 0.0
        %716 = vmatprep.subr.mxu0 0.0
        %717 = vmatpush1.msra.mxu0 0.0
        %718 = vmatprep.subr.mxu0 0.0
        %719 = vmatpush1.msra.mxu0 0.0
        %720 = vmatprep.subr.mxu0 0.0
        %721 = vmatpush1.msra.mxu0 0.0
        %722 = vmatprep.subr.mxu0 0.0
        %723 = vmatpush1.msra.mxu0 0.0
        %724 = vmatprep.subr.mxu0 0.0
        %725 = vmatpush1.msra.mxu0 0.0
        %726 = vmatprep.subr.mxu0 0.0
        %727 = vmatpush1.msra.mxu0 0.0
        %728 = vmatprep.subr.mxu0 0.0
        %729 = vmatpush1.msra.mxu0 0.0
        %730 = vmatprep.subr.mxu0 0.0
        %731 = vmatpush1.msra.mxu0 0.0
        %732 = vmatprep.subr.mxu0 0.0
        %733 = vmatpush1.msra.mxu0 0.0
        %734 = vmatprep.subr.mxu0 0.0
        %735 = vmatpush1.msra.mxu0 0.0
        %736 = vmatprep.subr.mxu0 0.0
        %737 = vmatpush1.msra.mxu0 0.0
        %738 = vmatprep.subr.mxu0 0.0
        %739 = vmatpush1.msra.mxu0 0.0
        %740 = vmatprep.mubr.f32.mxu0 0.0
        %741 = vmatmul.mubr.f32.gmra.mrb[0].mxu0 %v656
        %v742 = vpop.f32.mrb[0].mxu0
        %v743 = vadd.f32 0.0, %v742
        %v744 = vpop.f32.mrb[0].mxu0
        %745 = vmatprep.mubr.f32.mxu0 0.0
        %746 = vmatmul.mubr.f32.gmra.mrb[0].mxu0 %v657
        %v747 = vpop.f32.mrb[0].mxu0
        %v748 = vadd.f32 0.0, %v747
        %v749 = vpop.f32.mrb[0].mxu0
        %750 = vmatprep.mubr.f32.mxu0 0.0
        %751 = vmatmul.mubr.f32.gmra.mrb[0].mxu0 %v658
        %v752 = vpop.f32.mrb[0].mxu0
        %v753 = vadd.f32 0.0, %v752
        %v754 = vpop.f32.mrb[0].mxu0
        %755 = vmatprep.mubr.f32.mxu0 0.0
        %756 = vmatmul.mubr.f32.gmra.mrb[0].mxu0 %v659
        %v757 = vpop.f32.mrb[0].mxu0
        %v758 = vadd.f32 0.0, %v757
        %v759 = vpop.f32.mrb[0].mxu0
        %760 = vdwg.mxu0
        %v761 = vmax.f32 %v743, %v748
        %v762 = vsub.f32 %v743, %v761
        %v763 = vmul.f32 %v762, 1.442695
        %v764 = vpow.pop %v763
        %v765 = vsub.f32 %v748, %v761
        %v766 = vmul.f32 %v765, 1.442695
        %v767 = vpow.pop %v766
        %v768 = vadd.f32 %v764, %v767
        %v769 = vmul.f32 %v764, %v650
        %v770 = vmul.f32 %v767, %v653
        %v771 = vadd.f32 %v769, %v770
        %v772 = vrcp.pop %v768
        %v773 = vmul.f32 %v771, %v772
        %v774 = vmax.f32 %v753, %v758
        %v775 = vsub.f32 %v753, %v774
        %v776 = vmul.f32 %v775, 1.442695
        %v777 = vpow.pop %v776
        %v778 = vsub.f32 %v758, %v774
        %v779 = vmul.f32 %v778, 1.442695
        %v780 = vpow.pop %v779
        %v781 = vadd.f32 %v777, %v780
        %v782 = vmul.f32 %v777, %v650
        %v783 = vmul.f32 %v780, %v653
        %v784 = vadd.f32 %v782, %v783
        %v785 = vrcp.pop %v781
        %v786 = vmul.f32 %v784, %v785
        %v787 = vpack.c.bf16 %v786, %v773
        %v788 = vld [vmem:[%s321 + $0xc] sm:$0xf]
        %v789 = vld [vmem:[%s321 + $0x24] sm:$0xf]
        %v790 = vld [vmem:[%s321 + $0x3c] sm:$0xf]
        %v791 = vld [vmem:[%s321 + $0x54] sm:$0xf]
        %v792 = vld [vmem:[%s321 + $0x6c] sm:$0xf]
        %v793 = vld [vmem:[%s321 + $0x84] sm:$0xf]
        %v794 = vld [vmem:[%s321 + $0x9c] sm:$0xf]
        %v795 = vld [vmem:[%s321 + $0xb4] sm:$0xf]
        %v796 = vld [vmem:[%s321 + $0xcc] sm:$0xf]
        %v797 = vld [vmem:[%s321 + $0xe4] sm:$0xf]
        %v798 = vld [vmem:[%s321 + $0xfc] sm:$0xf]
        %v799 = vld [vmem:[%s321 + $0x114] sm:$0xf]
        %v800 = vld [vmem:[%s321 + $0x12c] sm:$0xf]
        %v801 = vld [vmem:[%s321 + $0x144] sm:$0xf]
        %v802 = vld [vmem:[%s321 + $0x15c] sm:$0xf]
        %v803 = vld [vmem:[%s321 + $0x174] sm:$0xf]
        %v804 = vld [vmem:[%s380] sm:$0x1]
        %v805 = vlaneseq
        %v806 = vshrl.u32 %v805, 7
        %v807 = vsub.s32 0, %v806
        %v808 = vrot.slane %v804, %v807
        %v825 = vunpack.c.l.b16 %v788
        %v826 = vunpack.c.l.b16 %v789
        %v827 = vunpack.c.l.b16 %v790
        %v828 = vunpack.c.l.b16 %v791
        %v829 = vunpack.c.l.b16 %v792
        %v830 = vunpack.c.l.b16 %v793
        %v831 = vunpack.c.l.b16 %v794
        %v832 = vunpack.c.l.b16 %v795
        %v833 = vunpack.c.l.b16 %v796
        %v834 = vunpack.c.l.b16 %v797
        %v835 = vunpack.c.l.b16 %v798
        %v836 = vunpack.c.l.b16 %v799
        %v837 = vunpack.c.l.b16 %v800
        %v838 = vunpack.c.l.b16 %v801
        %v839 = vunpack.c.l.b16 %v802
        %v840 = vunpack.c.l.b16 %v803
        %v841 = vpack.c.b16 %v826, %v825
        %v842 = vpack.c.b16 %v828, %v827
        %v843 = vpack.c.b16 %v830, %v829
        %v844 = vpack.c.b16 %v832, %v831
        %v845 = vpack.c.b16 %v834, %v833
        %v846 = vpack.c.b16 %v836, %v835
        %v847 = vpack.c.b16 %v838, %v837
        %v848 = vpack.c.b16 %v840, %v839
        %857 = vmatprep.subr.bf16.mxu0 0
        %858 = vmatpush1.bf16.msra.mxu0 %v841
        %859 = vmatprep.subr.bf16.mxu0 0
        %860 = vmatpush1.bf16.msra.mxu0 %v842
        %861 = vmatprep.subr.bf16.mxu0 0
        %862 = vmatpush1.bf16.msra.mxu0 %v843
        %863 = vmatprep.subr.bf16.mxu0 0
        %864 = vmatpush1.bf16.msra.mxu0 %v844
        %865 = vmatprep.subr.bf16.mxu0 0
        %866 = vmatpush1.bf16.msra.mxu0 %v845
        %867 = vmatprep.subr.bf16.mxu0 0
        %868 = vmatpush1.bf16.msra.mxu0 %v846
        %869 = vmatprep.subr.bf16.mxu0 0
        %870 = vmatpush1.bf16.msra.mxu0 %v847
        %871 = vmatprep.subr.bf16.mxu0 0
        %872 = vmatpush1.bf16.msra.mxu0 %v848
        %873 = vmatprep.subr.bf16.mxu0 0
        %874 = vmatpush1.bf16.msra.mxu0 0
        %875 = vmatprep.subr.bf16.mxu0 0
        %876 = vmatpush1.bf16.msra.mxu0 0
        %877 = vmatprep.subr.bf16.mxu0 0
        %878 = vmatpush1.bf16.msra.mxu0 0
        %879 = vmatprep.subr.bf16.mxu0 0
        %880 = vmatpush1.bf16.msra.mxu0 0
        %881 = vmatprep.subr.bf16.mxu0 0
        %882 = vmatpush1.bf16.msra.mxu0 0
        %883 = vmatprep.subr.bf16.mxu0 0
        %884 = vmatpush1.bf16.msra.mxu0 0
        %885 = vmatprep.subr.bf16.mxu0 0
        %886 = vmatpush1.bf16.msra.mxu0 0
        %887 = vmatprep.subr.bf16.mxu0 0
        %888 = vmatpush1.bf16.msra.mxu0 0
        %889 = vmatprep.mubr.bf16.mxu0 0
        %890 = vmatmul.mubr.bf16.gmra.mrb[0].mxu0 %v787
        %v891 = vpop.f32.mrb[0].mxu0
        %v892 = vadd.f32 %v808, %v891
        %v893 = vpop.f32.mrb[0].mxu0
        %v894 = vpop.f32.mrb[0].mxu0
        %v895 = vadd.f32 %v808, %v894
        %v896 = vpop.f32.mrb[0].mxu0
        %897 = vdwg.mxu0
        %v898 = vadd.f32 %v392, %v892
        %v899 = vadd.f32 %v393, %v895
        %v900 = vld [vmem:[%s380 + $0x1] sm:$0x1]
        %v901 = vld [vmem:[%s380 + $0x2] sm:$0x1]
        %902 = vadd.xlane.f32.xlu0 %v898
        %v903 = vpop.xlane.xlu0 %902
        %904 = vadd.xlane.f32.xlu0 %v899
        %v905 = vpop.xlane.xlu0 %904
        %v906 = vrcp.pop 128.0
        %v907 = vmul.f32 %v903, %v906
        %v908 = vmul.f32 %v905, %v906
        %v909 = vsub.f32 %v898, %v907
        %v910 = vsub.f32 %v899, %v908
        %v911 = vmul.f32 %v909, %v909
        %v912 = vmul.f32 %v910, %v910
        %913 = vadd.xlane.f32.xlu0 %v911
        %v914 = vpop.xlane.xlu0 %913
        %915 = vadd.xlane.f32.xlu0 %v912
        %v916 = vpop.xlane.xlu0 %915
        %v917 = vmul.f32 %v914, %v906
        %v918 = vmul.f32 %v916, %v906
        %v919 = vadd.f32 %v917, 1e-05
        %v920 = vadd.f32 %v918, 1e-05
        %v921 = vrsqrt.pop %v919
        %v922 = vrsqrt.pop %v920
        %v923 = vmul.f32 %v909, %v921
        %v924 = vmul.f32 %v910, %v922
        %v925 = vlaneseq
        %v926 = vshrl.u32 %v925, 7
        %v927 = vsub.s32 0, %v926
        %v928 = vrot.slane %v900, %v927
        %v929 = vmul.f32 %v923, %v928
        %v930 = vmul.f32 %v924, %v928
        %v931 = vlaneseq
        %v932 = vshrl.u32 %v931, 7
        %v933 = vsub.s32 0, %v932
        %v934 = vrot.slane %v901, %v933
        %v935 = vadd.f32 %v929, %v934
        %v936 = vadd.f32 %v930, %v934
        %v937 = vpack.c.bf16 %v936, %v935
        %v938 = vld [vmem:[%s321 + $0x10] sm:$0xf]
        %v939 = vld [vmem:[%s321 + $0x28] sm:$0xf]
        %v940 = vld [vmem:[%s321 + $0x40] sm:$0xf]
        %v941 = vld [vmem:[%s321 + $0x58] sm:$0xf]
        %v942 = vld [vmem:[%s321 + $0x70] sm:$0xf]
        %v943 = vld [vmem:[%s321 + $0x88] sm:$0xf]
        %v944 = vld [vmem:[%s321 + $0xa0] sm:$0xf]
        %v945 = vld [vmem:[%s321 + $0xb8] sm:$0xf]
        %v946 = vld [vmem:[%s321 + $0xd0] sm:$0xf]
        %v947 = vld [vmem:[%s321 + $0xe8] sm:$0xf]
        %v948 = vld [vmem:[%s321 + $0x100] sm:$0xf]
        %v949 = vld [vmem:[%s321 + $0x118] sm:$0xf]
        %v950 = vld [vmem:[%s321 + $0x130] sm:$0xf]
        %v951 = vld [vmem:[%s321 + $0x148] sm:$0xf]
        %v952 = vld [vmem:[%s321 + $0x160] sm:$0xf]
        %v953 = vld [vmem:[%s321 + $0x178] sm:$0xf]
        %v954 = vld [vmem:[%s380 + $0x3] sm:$0x1]
        %v955 = vlaneseq
        %v956 = vshrl.u32 %v955, 7
        %v957 = vsub.s32 0, %v956
        %v958 = vrot.slane %v954, %v957
        %v975 = vunpack.c.l.b16 %v938
        %v976 = vunpack.c.l.b16 %v939
        %v977 = vunpack.c.l.b16 %v940
        %v978 = vunpack.c.l.b16 %v941
        %v979 = vunpack.c.l.b16 %v942
        %v980 = vunpack.c.l.b16 %v943
        %v981 = vunpack.c.l.b16 %v944
        %v982 = vunpack.c.l.b16 %v945
        %v983 = vunpack.c.l.b16 %v946
        %v984 = vunpack.c.l.b16 %v947
        %v985 = vunpack.c.l.b16 %v948
        %v986 = vunpack.c.l.b16 %v949
        %v987 = vunpack.c.l.b16 %v950
        %v988 = vunpack.c.l.b16 %v951
        %v989 = vunpack.c.l.b16 %v952
        %v990 = vunpack.c.l.b16 %v953
        %v991 = vpack.c.b16 %v976, %v975
        %v992 = vpack.c.b16 %v978, %v977
        %v993 = vpack.c.b16 %v980, %v979
        %v994 = vpack.c.b16 %v982, %v981
        %v995 = vpack.c.b16 %v984, %v983
        %v996 = vpack.c.b16 %v986, %v985
        %v997 = vpack.c.b16 %v988, %v987
        %v998 = vpack.c.b16 %v990, %v989
        %1007 = vmatprep.subr.bf16.mxu0 0
        %1008 = vmatpush1.bf16.msra.mxu0 %v991
        %1009 = vmatprep.subr.bf16.mxu0 0
        %1010 = vmatpush1.bf16.msra.mxu0 %v992
        %1011 = vmatprep.subr.bf16.mxu0 0
        %1012 = vmatpush1.bf16.msra.mxu0 %v993
        %1013 = vmatprep.subr.bf16.mxu0 0
        %1014 = vmatpush1.bf16.msra.mxu0 %v994
        %1015 = vmatprep.subr.bf16.mxu0 0
        %1016 = vmatpush1.bf16.msra.mxu0 %v995
        %1017 = vmatprep.subr.bf16.mxu0 0
        %1018 = vmatpush1.bf16.msra.mxu0 %v996
        %1019 = vmatprep.subr.bf16.mxu0 0
        %1020 = vmatpush1.bf16.msra.mxu0 %v997
        %1021 = vmatprep.subr.bf16.mxu0 0
        %1022 = vmatpush1.bf16.msra.mxu0 %v998
        %1023 = vmatprep.subr.bf16.mxu0 0
        %1024 = vmatpush1.bf16.msra.mxu0 0
        %1025 = vmatprep.subr.bf16.mxu0 0
        %1026 = vmatpush1.bf16.msra.mxu0 0
        %1027 = vmatprep.subr.bf16.mxu0 0
        %1028 = vmatpush1.bf16.msra.mxu0 0
        %1029 = vmatprep.subr.bf16.mxu0 0
        %1030 = vmatpush1.bf16.msra.mxu0 0
        %1031 = vmatprep.subr.bf16.mxu0 0
        %1032 = vmatpush1.bf16.msra.mxu0 0
        %1033 = vmatprep.subr.bf16.mxu0 0
        %1034 = vmatpush1.bf16.msra.mxu0 0
        %1035 = vmatprep.subr.bf16.mxu0 0
        %1036 = vmatpush1.bf16.msra.mxu0 0
        %1037 = vmatprep.subr.bf16.mxu0 0
        %1038 = vmatpush1.bf16.msra.mxu0 0
        %1039 = vmatprep.mubr.bf16.mxu0 0
        %1040 = vmatmul.mubr.bf16.gmra.mrb[0].mxu0 %v937
        %v1041 = vpop.f32.mrb[0].mxu0
        %v1042 = vadd.f32 %v958, %v1041
        %v1043 = vpop.f32.mrb[0].mxu0
        %v1044 = vpop.f32.mrb[0].mxu0
        %v1045 = vadd.f32 %v958, %v1044
        %v1046 = vpop.f32.mrb[0].mxu0
        %1047 = vdwg.mxu0
        %v1048 = vmax.f32 %v1042, 0.0
        %v1049 = vmax.f32 %v1045, 0.0
        %v1050 = vpack.c.bf16 %v1049, %v1048
        %v1051 = vld [vmem:[%s321 + $0x14] sm:$0xf]
        %v1052 = vld [vmem:[%s321 + $0x2c] sm:$0xf]
        %v1053 = vld [vmem:[%s321 + $0x44] sm:$0xf]
        %v1054 = vld [vmem:[%s321 + $0x5c] sm:$0xf]
        %v1055 = vld [vmem:[%s321 + $0x74] sm:$0xf]
        %v1056 = vld [vmem:[%s321 + $0x8c] sm:$0xf]
        %v1057 = vld [vmem:[%s321 + $0xa4] sm:$0xf]
        %v1058 = vld [vmem:[%s321 + $0xbc] sm:$0xf]
        %v1059 = vld [vmem:[%s321 + $0xd4] sm:$0xf]
        %v1060 = vld [vmem:[%s321 + $0xec] sm:$0xf]
        %v1061 = vld [vmem:[%s321 + $0x104] sm:$0xf]
        %v1062 = vld [vmem:[%s321 + $0x11c] sm:$0xf]
        %v1063 = vld [vmem:[%s321 + $0x134] sm:$0xf]
        %v1064 = vld [vmem:[%s321 + $0x14c] sm:$0xf]
        %v1065 = vld [vmem:[%s321 + $0x164] sm:$0xf]
        %v1066 = vld [vmem:[%s321 + $0x17c] sm:$0xf]
        %v1067 = vld [vmem:[%s380 + $0x4] sm:$0x1]
        %v1068 = vlaneseq
        %v1069 = vshrl.u32 %v1068, 7
        %v1070 = vsub.s32 0, %v1069
        %v1071 = vrot.slane %v1067, %v1070
        %v1088 = vunpack.c.l.b16 %v1051
        %v1089 = vunpack.c.l.b16 %v1052
        %v1090 = vunpack.c.l.b16 %v1053
        %v1091 = vunpack.c.l.b16 %v1054
        %v1092 = vunpack.c.l.b16 %v1055
        %v1093 = vunpack.c.l.b16 %v1056
        %v1094 = vunpack.c.l.b16 %v1057
        %v1095 = vunpack.c.l.b16 %v1058
        %v1096 = vunpack.c.l.b16 %v1059
        %v1097 = vunpack.c.l.b16 %v1060
        %v1098 = vunpack.c.l.b16 %v1061
        %v1099 = vunpack.c.l.b16 %v1062
        %v1100 = vunpack.c.l.b16 %v1063
        %v1101 = vunpack.c.l.b16 %v1064
        %v1102 = vunpack.c.l.b16 %v1065
        %v1103 = vunpack.c.l.b16 %v1066
        %v1104 = vpack.c.b16 %v1089, %v1088
        %v1105 = vpack.c.b16 %v1091, %v1090
        %v1106 = vpack.c.b16 %v1093, %v1092
        %v1107 = vpack.c.b16 %v1095, %v1094
        %v1108 = vpack.c.b16 %v1097, %v1096
        %v1109 = vpack.c.b16 %v1099, %v1098
        %v1110 = vpack.c.b16 %v1101, %v1100
        %v1111 = vpack.c.b16 %v1103, %v1102
        %1120 = vmatprep.subr.bf16.mxu0 0
        %1121 = vmatpush1.bf16.msra.mxu0 %v1104
        %1122 = vmatprep.subr.bf16.mxu0 0
        %1123 = vmatpush1.bf16.msra.mxu0 %v1105
        %1124 = vmatprep.subr.bf16.mxu0 0
        %1125 = vmatpush1.bf16.msra.mxu0 %v1106
        %1126 = vmatprep.subr.bf16.mxu0 0
        %1127 = vmatpush1.bf16.msra.mxu0 %v1107
        %1128 = vmatprep.subr.bf16.mxu0 0
        %1129 = vmatpush1.bf16.msra.mxu0 %v1108
        %1130 = vmatprep.subr.bf16.mxu0 0
        %1131 = vmatpush1.bf16.msra.mxu0 %v1109
        %1132 = vmatprep.subr.bf16.mxu0 0
        %1133 = vmatpush1.bf16.msra.mxu0 %v1110
        %1134 = vmatprep.subr.bf16.mxu0 0
        %1135 = vmatpush1.bf16.msra.mxu0 %v1111
        %1136 = vmatprep.subr.bf16.mxu0 0
        %1137 = vmatpush1.bf16.msra.mxu0 0
        %1138 = vmatprep.subr.bf16.mxu0 0
        %1139 = vmatpush1.bf16.msra.mxu0 0
        %1140 = vmatprep.subr.bf16.mxu0 0
        %1141 = vmatpush1.bf16.msra.mxu0 0
        %1142 = vmatprep.subr.bf16.mxu0 0
        %1143 = vmatpush1.bf16.msra.mxu0 0
        %1144 = vmatprep.subr.bf16.mxu0 0
        %1145 = vmatpush1.bf16.msra.mxu0 0
        %1146 = vmatprep.subr.bf16.mxu0 0
        %1147 = vmatpush1.bf16.msra.mxu0 0
        %1148 = vmatprep.subr.bf16.mxu0 0
        %1149 = vmatpush1.bf16.msra.mxu0 0
        %1150 = vmatprep.subr.bf16.mxu0 0
        %1151 = vmatpush1.bf16.msra.mxu0 0
        %1152 = vmatprep.mubr.bf16.mxu0 0
        %1153 = vmatmul.mubr.bf16.gmra.mrb[0].mxu0 %v1050
        %v1154 = vpop.f32.mrb[0].mxu0
        %v1155 = vadd.f32 %v1071, %v1154
        %v1156 = vpop.f32.mrb[0].mxu0
        %v1157 = vpop.f32.mrb[0].mxu0
        %v1158 = vadd.f32 %v1071, %v1157
        %v1159 = vpop.f32.mrb[0].mxu0
        %1160 = vdwg.mxu0
        %v1161 = vadd.f32 %v935, %v1155
        %v1162 = vadd.f32 %v936, %v1158
        %v1163 = vld [vmem:[%s380 + $0x5] sm:$0x1]
        %v1164 = vld [vmem:[%s380 + $0x6] sm:$0x1]
        %1165 = vadd.xlane.f32.xlu0 %v1161
        %v1166 = vpop.xlane.xlu0 %1165
        %1167 = vadd.xlane.f32.xlu0 %v1162
        %v1168 = vpop.xlane.xlu0 %1167
        %v1169 = vmul.f32 %v1166, %v906
        %v1170 = vmul.f32 %v1168, %v906
        %v1171 = vsub.f32 %v1161, %v1169
        %v1172 = vsub.f32 %v1162, %v1170
        %v1173 = vmul.f32 %v1171, %v1171
        %v1174 = vmul.f32 %v1172, %v1172
        %1175 = vadd.xlane.f32.xlu0 %v1173
        %v1176 = vpop.xlane.xlu0 %1175
        %1177 = vadd.xlane.f32.xlu0 %v1174
        %v1178 = vpop.xlane.xlu0 %1177
        %v1179 = vmul.f32 %v1176, %v906
        %v1180 = vmul.f32 %v1178, %v906
        %v1181 = vadd.f32 %v1179, 1e-05
        %v1182 = vadd.f32 %v1180, 1e-05
        %v1183 = vrsqrt.pop %v1181
        %v1184 = vrsqrt.pop %v1182
        %v1185 = vmul.f32 %v1171, %v1183
        %v1186 = vmul.f32 %v1172, %v1184
        %v1187 = vlaneseq
        %v1188 = vshrl.u32 %v1187, 7
        %v1189 = vsub.s32 0, %v1188
        %v1190 = vrot.slane %v1163, %v1189
        %v1191 = vmul.f32 %v1185, %v1190
        %v1192 = vmul.f32 %v1186, %v1190
        %v1193 = vlaneseq
        %v1194 = vshrl.u32 %v1193, 7
        %v1195 = vsub.s32 0, %v1194
        %v1196 = vrot.slane %v1164, %v1195
        %v1197 = vadd.f32 %v1191, %v1196
        %v1198 = vadd.f32 %v1192, %v1196
        %1199 = vst [vmem:[#allocation2] sm:$0xff] %v1197
        %1200 = vst [vmem:[#allocation2 + $0x8] sm:$0xff] %v1198
        %p1201 = scmp.eq.s32.totalorder %s26, 1
        // Predicated region
        $region73: #{transformer_model.1} parent=47 // pred_check
          %p1202 = pneg %p1201
        $region74: #{transformer_model.1} parent=47 // pred_check_branch
          %1204 = sbr.rel (%p1202) target = $region76
        $region75: #{transformer_model.1} parent=47 // pred_region
          %v1205 = vrot.slane %v1197, 4
          %v1206 = vadd.f32 %v1197, %v1205
          %v1207 = vrot.slane %v1206, 2
          %v1208 = vadd.f32 %v1206, %v1207
          %v1209 = vrot.slane %v1208, 1
          %v1210 = vadd.f32 %v1208, %v1209
          %v1211 = vrot.slane %v1198, 4
          %v1212 = vadd.f32 %v1198, %v1211
          %v1213 = vrot.slane %v1212, 2
          %v1214 = vadd.f32 %v1212, %v1213
          %v1215 = vrot.slane %v1214, 1
          %v1216 = vadd.f32 %v1214, %v1215
          %v1217 = vrcp.pop 8.0
          %v1218 = vmul.f32 %v1210, %v1217
          %v1219 = vmul.f32 %v1216, %v1217
          %v1220 = vpack.c.bf16 %v1218, %v1218
          %v1221 = vpack.c.bf16 %v1219, %v1219
          %v1222 = vld [vmem:[#allocation9] sm:$0xf]
          %v1223 = vld [vmem:[#allocation9 + $0x4] sm:$0xf]
          %v1224 = vld [vmem:[#allocation9 + $0x8] sm:$0xf]
          %v1225 = vld [vmem:[#allocation9 + $0xc] sm:$0xf]
          %v1226 = vld [vmem:[#allocation9 + $0x10] sm:$0xf]
          %v1227 = vld [vmem:[#allocation9 + $0x14] sm:$0xf]
          %v1228 = vld [vmem:[#allocation9 + $0x18] sm:$0xf]
          %v1229 = vld [vmem:[#allocation9 + $0x1c] sm:$0xf]
          %v1230 = vld [vmem:[#allocation9 + $0x20] sm:$0xf]
          %v1231 = vld [vmem:[#allocation9 + $0x24] sm:$0xf]
          %v1232 = vld [vmem:[#allocation9 + $0x28] sm:$0xf]
          %v1233 = vld [vmem:[#allocation9 + $0x2c] sm:$0xf]
          %v1234 = vld [vmem:[#allocation9 + $0x30] sm:$0xf]
          %v1235 = vld [vmem:[#allocation9 + $0x34] sm:$0xf]
          %v1236 = vld [vmem:[#allocation9 + $0x38] sm:$0xf]
          %v1237 = vld [vmem:[#allocation9 + $0x3c] sm:$0xf]
          %v1238 = vld [vmem:[#allocation11] sm:$0x1]
          %v1240 = vlaneseq
          %v1241 = vshrl.u32 %v1240, 7
          %v1242 = vsub.s32 0, %v1241
          %v1243 = vrot.slane %v1238, %v1242
          %v1247 = vunpack.c.l.b16 %v1220
          %v1248 = vunpack.c.l.b16 %v1221
          %vm1249 = vcmask 1041409
          %v1250 = vsel %vm1249, %v1248, %v1247
          %v1251 = vpack.c.b16 %v1250, %v1250
          %v1269 = vunpack.c.l.b16 %v1222
          %v1270 = vunpack.c.l.b16 %v1223
          %v1271 = vunpack.c.l.b16 %v1224
          %v1272 = vunpack.c.l.b16 %v1225
          %v1273 = vunpack.c.l.b16 %v1226
          %v1274 = vunpack.c.l.b16 %v1227
          %v1275 = vunpack.c.l.b16 %v1228
          %v1276 = vunpack.c.l.b16 %v1229
          %v1277 = vunpack.c.l.b16 %v1230
          %v1278 = vunpack.c.l.b16 %v1231
          %v1279 = vunpack.c.l.b16 %v1232
          %v1280 = vunpack.c.l.b16 %v1233
          %v1281 = vunpack.c.l.b16 %v1234
          %v1282 = vunpack.c.l.b16 %v1235
          %v1283 = vunpack.c.l.b16 %v1236
          %v1284 = vunpack.c.l.b16 %v1237
          %v1285 = vpack.c.b16 %v1270, %v1269
          %v1286 = vpack.c.b16 %v1272, %v1271
          %v1287 = vpack.c.b16 %v1274, %v1273
          %v1288 = vpack.c.b16 %v1276, %v1275
          %v1289 = vpack.c.b16 %v1278, %v1277
          %v1290 = vpack.c.b16 %v1280, %v1279
          %v1291 = vpack.c.b16 %v1282, %v1281
          %v1292 = vpack.c.b16 %v1284, %v1283
          %1301 = vmatprep.subr.bf16.mxu0 0
          %1302 = vmatpush1.bf16.msra.mxu0 %v1285
          %1303 = vmatprep.subr.bf16.mxu0 0
          %1304 = vmatpush1.bf16.msra.mxu0 %v1286
          %1305 = vmatprep.subr.bf16.mxu0 0
          %1306 = vmatpush1.bf16.msra.mxu0 %v1287
          %1307 = vmatprep.subr.bf16.mxu0 0
          %1308 = vmatpush1.bf16.msra.mxu0 %v1288
          %1309 = vmatprep.subr.bf16.mxu0 0
          %1310 = vmatpush1.bf16.msra.mxu0 %v1289
          %1311 = vmatprep.subr.bf16.mxu0 0
          %1312 = vmatpush1.bf16.msra.mxu0 %v1290
          %1313 = vmatprep.subr.bf16.mxu0 0
          %1314 = vmatpush1.bf16.msra.mxu0 %v1291
          %1315 = vmatprep.subr.bf16.mxu0 0
          %1316 = vmatpush1.bf16.msra.mxu0 %v1292
          %1317 = vmatprep.subr.bf16.mxu0 0
          %1318 = vmatpush1.bf16.msra.mxu0 0
          %1319 = vmatprep.subr.bf16.mxu0 0
          %1320 = vmatpush1.bf16.msra.mxu0 0
          %1321 = vmatprep.subr.bf16.mxu0 0
          %1322 = vmatpush1.bf16.msra.mxu0 0
          %1323 = vmatprep.subr.bf16.mxu0 0
          %1324 = vmatpush1.bf16.msra.mxu0 0
          %1325 = vmatprep.subr.bf16.mxu0 0
          %1326 = vmatpush1.bf16.msra.mxu0 0
          %1327 = vmatprep.subr.bf16.mxu0 0
          %1328 = vmatpush1.bf16.msra.mxu0 0
          %1329 = vmatprep.subr.bf16.mxu0 0
          %1330 = vmatpush1.bf16.msra.mxu0 0
          %1331 = vmatprep.subr.bf16.mxu0 0
          %1332 = vmatpush1.bf16.msra.mxu0 0
          %1333 = vmatprep.mubr.bf16.mxu0 0
          %1334 = vmatmul.mubr.bf16.gmra.mrb[0].mxu0 %v1251
          %v1335 = vpop.f32.mrb[0].mxu0
          %v1336 = vadd.f32 %v1243, %v1335
          %v1337 = vpop.f32.mrb[0].mxu0
          %v1338 = vpop.f32.mrb[0].mxu0
          %v1339 = vpop.f32.mrb[0].mxu0
          %1340 = vdwg.mxu0
          %1341 = vst [vmem:[#allocation12] sm:$0x3] %v1336
        $region76: #{transformer_model.1} parent=47 // pred_fallthru
          _
        // Predicated region
        $region77: #{transformer_model.1} parent=47 // pred_check
          %p1342 = pneg %p201
        $region78: #{transformer_model.1} parent=47 // pred_check_branch
          %1344 = sbr.rel (%p1342) target = $region80
        $region79: #{transformer_model.1} parent=47 // pred_region
          %s1346 = ssub.s32 32, 32
          %1347 = vsyncadd [#allocation5], %s1346
          %s1349 = sshll.u32 [#allocation12], 4
          %s1350 = int_to_ptr.vmem [resolvable:$true] %s1349
          %1352 = dma.vmem_to_hbm [thread:$0]  %s1350, 32, %s7, [#allocation5]
        $region80: #{transformer_model.1} parent=47 // pred_fallthru
          _
        // Predicated region
        $region81: #{transformer_model.1} parent=47 // pred_check
          %p1353 = pneg %p201
        $region82: #{transformer_model.1} parent=47 // pred_check_branch
          %1355 = sbr.rel (%p1353) target = $region84
        $region83: #{transformer_model.1} parent=47 // pred_region
          %1356 = dma.done [#allocation5], 32
        $region84: #{transformer_model.1} parent=47 // pred_fallthru
          _
      $region48: #{transformer_model.1} parent=5 // pred_fallthru
        _
      %p1357 = scmp.le.s32.totalorder 2, %s21
      // Predicated region
      $region85: #{transformer_model.1} parent=5 // pred_check
        %p1358 = pneg %p1357
      $region86: #{transformer_model.1} parent=5 // pred_check_branch
        %1360 = sbr.rel (%p1358) target = $region88
      $region87: #{transformer_model.1} parent=5 // pred_region
        %s1361 = ssub.s32 %s21, 2
      $region88: #{transformer_model.1} parent=5 // pred_fallthru
        _
    $region6: #{transformer_model.1} parent=1 // loop_footer
      %s25 = sadd.s32 1, %s21
    $region7: #{transformer_model.1} parent=1 // loop_footer_branch
      %20 = sbr.rel target = $region3
    $region8: #{transformer_model.1} parent=1 // loop_exit
      _
    %1362 = vsyncpa [#allocation4], 1
    %s1363 = scalar_lea.sflag [#allocation4], 1
    %1364 = vsyncpa %s1363, 1
    %1365 = vsyncpa [#allocation7], 1
    %s1366 = scalar_lea.sflag [#allocation7], 1
    %1367 = vsyncpa %s1366, 1
    %1368 = vsyncpa [#allocation10], 1
    %1369 = vsyncpa [#allocation5], 1
    %s1370 = scalar_lea.sflag [#allocation5], 1
    %1371 = vsyncpa %s1370, 1

</llo_original>
